<compile_context>
chip_gen: v7x
topology: tpu7x:2x2x1
jax: 0.10.0
libtpu: 0.0.40
codegen_flags: <defaults>
</compile_context>

<pallas_src>
import jax
import jax.numpy as jnp
from jax.experimental import pallas as pl
from jax.experimental.pallas import tpu as pltpu  # noqa: F401  (TPU backend namespace)

# ----------------------------- config (small, synthetic) ----------------------------
B, S, D = 2, 8, 32        # batch, seq_len, d_model
H = 4                      # num heads
DN = 8                     # nope head dim
DR = 4                     # rope head dim (decoupled)
DV = 8                     # value head dim
RQ = 16                    # q lora rank
RKV = 16                   # kv lora rank
HID = 64                   # ff hidden dim
EPS = 1e-6
SCALE = 1.0 / float((DN + DR) ** 0.5)
BS = B * S


def _rmsnorm(v, w):
    # v: (rows, F), w: (1, F)
    var = jnp.mean(v * v, axis=-1, keepdims=True)
    return v * jax.lax.rsqrt(var + EPS) * w


def _dot(a, b):
    return jnp.dot(a, b, preferred_element_type=jnp.float32)


def _dot_nt(a, b):
    # a @ b.T without materializing the transpose (MXU "NT" matmul)
    return jax.lax.dot_general(a, b, (((1,), (1,)), ((), ())),
                               preferred_element_type=jnp.float32)


# --------------------------------- Pallas kernel ------------------------------------
def block_kernel(x_ref, norms_ref, trig_ref, mask_ref,
                 wf1_ref, wf2_ref, wkn_ref, wvo_ref, w13_ref, w2_ref,
                 o_ref):
    x = x_ref[...]                      # (BS, D)
    norms = norms_ref[...]              # (1, 2*D + RQ + RKV) = [n1 | n2 | qn | kvn]
    trig = trig_ref[...]                # (BS, 2*H*DR)        = [cos_q | sin_q]
    mask = mask_ref[...]                # (BS, BS) block-diagonal causal mask

    n1 = norms[:, :D]
    n2 = norms[:, D:2 * D]
    qn_w = norms[:, 2 * D:2 * D + RQ]
    kvn_w = norms[:, 2 * D + RQ:]

    cos_q = trig[:, :H * DR]            # (BS, H*DR)
    sin_q = trig[:, H * DR:]
    cos_k = trig[:, :DR]                # k-side tables = first DR columns (same per head)
    sin_k = trig[:, H * DR:H * DR + DR]

    # ---------------- attention branch (MLA) ----------------
    h = _rmsnorm(x, n1)                                            # (BS, D)

    # fused: [cq_pre | ckv_pre | k_rope_raw | k_rope_swapped]
    t1 = _dot(h, wf1_ref[...])                                     # (BS, RQ+RKV+2*DR)
    cq = _rmsnorm(t1[:, :RQ], qn_w)                                # (BS, RQ)
    ckv = _rmsnorm(t1[:, RQ:RQ + RKV], kvn_w)                      # (BS, RKV)
    k_rope = (t1[:, RQ + RKV:RQ + RKV + DR] * cos_k
              + t1[:, RQ + RKV + DR:] * sin_k)                     # (BS, DR), RoPE on VPU

    # fused (SCALE pre-folded): [q_nope | q_rope_raw | q_rope_swapped]  (all heads at once)
    t2 = _dot(cq, wf2_ref[...])                                    # (BS, H*DN + 2*H*DR)
    q_nope = t2[:, :H * DN]                                        # (BS, H*DN)
    q_rope = (t2[:, H * DN:H * DN + H * DR] * cos_q
              + t2[:, H * DN + H * DR:] * sin_q)                   # (BS, H*DR)

    k_nope = _dot(ckv, wkn_ref[...])                               # (BS, H*DN)

    # one score/softmax/PV path per head over ALL BS rows (block-diag mask keeps batches
    # from attending to each other); no concatenates anywhere.
    attn = jnp.zeros((BS, D), jnp.float32)
    for hh in range(H):                                            # static unroll (H=4)
        qn_h = q_nope[:, hh * DN:(hh + 1) * DN]                    # (BS, DN)
        kn_h = k_nope[:, hh * DN:(hh + 1) * DN]                    # (BS, DN)
        qr_h = q_rope[:, hh * DR:(hh + 1) * DR]                    # (BS, DR)

        s_ = _dot_nt(qn_h, kn_h) + _dot_nt(qr_h, k_rope) + mask    # (BS, BS)
        s_ = s_ - jnp.max(s_, axis=-1, keepdims=True)
        e = jnp.exp(s_)
        p = e * pl.reciprocal(jnp.sum(e, axis=-1, keepdims=True), approx=True)

        # wvo[h] = wv_h @ wo_h folded at setup: output projection fused into PV.
        attn = attn + _dot(p, _dot(ckv, wvo_ref[hh]))              # (BS, D)

    x1 = x + attn

    # ---------------- feed-forward branch (GLU / SwiGLU) ----------------
    h2 = _rmsnorm(x1, n2)
    gu = _dot(h2, w13_ref[...])                                    # (BS, 2*HID) = 128 lanes
    ff = _dot(jax.nn.silu(gu[:, :HID]) * gu[:, HID:], w2_ref[...])

    o_ref[...] = x1 + ff


# ---------------------- one-time parameter fusion (outside forward) ------------------
def fuse_params(params, cos_e, sin_e, swap):
    """Runs once at setup: weight fusion, RoPE-swap folding, mask/table construction."""
    (n1, n2, wcq, qn, wqn, wqr, wckv, kvn, wkn, wv, wkr, wo, w1, w3, w2) = params

    swap_full = jnp.kron(jnp.eye(H, dtype=jnp.float32), swap)          # (H*DR, H*DR)
    wf1 = jnp.concatenate([wcq, wckv, wkr, wkr @ swap], axis=1)        # (D, RQ+RKV+2*DR)
    wf2 = SCALE * jnp.concatenate([wqn, wqr, wqr @ swap_full], axis=1)  # (RQ, H*DN+2*H*DR)

    # fold value + output projections per head:  wvo[h] = wv_h @ wo_h  -> (H, RKV, D)
    wvo = jnp.stack([wv[:, hh * DV:(hh + 1) * DV] @ wo[hh * DV:(hh + 1) * DV, :]
                     for hh in range(H)], axis=0)

    w13 = jnp.concatenate([w1, w3], axis=1)                            # (D, 2*HID)
    norms = jnp.concatenate([n1, n2, qn, kvn], axis=1)                 # (1, 2*D+RQ+RKV)

    # RoPE tables expanded to the flattened (B*S, ...) row layout (row = b*S + s)
    cos_q = jnp.tile(cos_e, (B, H))                                    # (BS, H*DR)
    sin_q = jnp.tile(sin_e, (B, H))
    trig = jnp.concatenate([cos_q, sin_q], axis=1)                     # (BS, 2*H*DR)

    # block-diagonal causal mask: cross-batch attention fully masked
    causal = jnp.where(jnp.tril(jnp.ones((S, S), bool)), 0.0, -1e9).astype(jnp.float32)
    mask_bd = jnp.full((BS, BS), -1e9, jnp.float32)
    for b in range(B):
        mask_bd = mask_bd.at[b * S:(b + 1) * S, b * S:(b + 1) * S].set(causal)

    return (norms, trig, mask_bd, wf1, wf2, wkn, wvo, w13, w2)


def block_forward(x, fused):
    norms, trig, mask_bd, wf1, wf2, wkn, wvo, w13, w2 = fused
    x_flat = x.reshape(BS, D)
    # Single invocation, no grid: every operand is a whole-array VMEM block (all tiny).
    out = pl.pallas_call(
        block_kernel,
        out_shape=jax.ShapeDtypeStruct((BS, D), jnp.float32),
    )(x_flat, norms, trig, mask_bd, wf1, wf2, wkn, wvo, w13, w2)
    return out.reshape(B, S, D)


# ------------------------------- reference (plain JAX) -------------------------------
def _block_math_ref(x, n1, n2, wcq, qn, wqn, wqr, wckv, kvn, wkn, wv, wkr, wo,
                    cos, sin, swap, mask, w1, w3, w2):
    """Original (unfused) Block forward for one batch element, per the PyTorch module."""
    h = _rmsnorm(x, n1)

    cq = _rmsnorm(_dot(h, wcq), qn)
    q_nope = _dot(cq, wqn)
    q_rope = _dot(cq, wqr)

    ckv = _rmsnorm(_dot(h, wckv), kvn)
    k_nope = _dot(ckv, wkn)
    v_all = _dot(ckv, wv)

    k_rope = _dot(h, wkr)
    k_rope = k_rope * cos + _dot(k_rope, swap) * sin

    attn_out = jnp.zeros((S, D), dtype=jnp.float32)
    for hh in range(H):
        qn_h = q_nope[:, hh * DN:(hh + 1) * DN]
        qr_h = q_rope[:, hh * DR:(hh + 1) * DR]
        qr_h = qr_h * cos + _dot(qr_h, swap) * sin
        kn_h = k_nope[:, hh * DN:(hh + 1) * DN]
        v_h = v_all[:, hh * DV:(hh + 1) * DV]

        scores = (_dot(qn_h, kn_h.T) + _dot(qr_h, k_rope.T)) * SCALE + mask
        scores = scores - jnp.max(scores, axis=-1, keepdims=True)
        e = jnp.exp(scores)
        p = e / jnp.sum(e, axis=-1, keepdims=True)
        o_h = _dot(p, v_h)
        attn_out = attn_out + _dot(o_h, wo[hh * DV:(hh + 1) * DV, :])

    x1 = x + attn_out

    h2 = _rmsnorm(x1, n2)
    g = jax.nn.silu(_dot(h2, w1))
    u = _dot(h2, w3)
    ff = _dot(g * u, w2)
    return x1 + ff


def block_reference(x, params, cos_e, sin_e, swap, mask):
    (n1, n2, wcq, qn, wqn, wqr, wckv, kvn, wkn, wv, wkr, wo, w1, w3, w2) = params

    def single(xb):
        return _block_math_ref(xb, n1, n2, wcq, qn, wqn, wqr, wckv, kvn, wkn, wv,
                               wkr, wo, cos_e, sin_e, swap, mask, w1, w3, w2)

    return jax.vmap(single)(x)


# ------------------------------------ setup ------------------------------------------
def make_params(key):
    ks = jax.random.split(key, 12)
    std = 0.02

    def w(k, shape):
        return (std * jax.random.normal(k, shape)).astype(jnp.float32)

    n1 = jnp.ones((1, D), jnp.float32)          # RMSNorm weights
    n2 = jnp.ones((1, D), jnp.float32)
    qn = jnp.ones((1, RQ), jnp.float32)
    kvn = jnp.ones((1, RKV), jnp.float32)

    wcq = w(ks[0], (D, RQ))
    wqn = w(ks[1], (RQ, H * DN))
    wqr = w(ks[2], (RQ, H * DR))
    wckv = w(ks[3], (D, RKV))
    wkn = w(ks[4], (RKV, H * DN))
    wv = w(ks[5], (RKV, H * DV))
    wkr = w(ks[6], (D, DR))
    wo = w(ks[7], (H * DV, D))
    w1 = w(ks[8], (D, HID))                     # GLU gate proj
    w3 = w(ks[9], (D, HID))                     # GLU up proj
    w2 = w(ks[10], (HID, D))                    # GLU down proj
    return (n1, n2, wcq, qn, wqn, wqr, wckv, kvn, wkn, wv, wkr, wo, w1, w3, w2)


def make_rope_and_mask():
    # interleaved (view_as_complex style) RoPE tables, expanded to rope_head_dim
    inv_freq = 1.0 / (10000.0 ** (jnp.arange(0, DR, 2, dtype=jnp.float32) / DR))
    t = jnp.arange(S, dtype=jnp.float32)
    ang = jnp.outer(t, inv_freq)                           # (S, DR/2)
    cos_e = jnp.repeat(jnp.cos(ang), 2, axis=-1)           # (S, DR)
    sin_e = jnp.repeat(jnp.sin(ang), 2, axis=-1)           # (S, DR)

    # pair-swap-with-sign matrix: (x @ swap)[2i] = -x[2i+1], (x @ swap)[2i+1] = x[2i]
    swap = jnp.zeros((DR, DR), jnp.float32)
    for i in range(DR // 2):
        swap = swap.at[2 * i + 1, 2 * i].set(-1.0)
        swap = swap.at[2 * i, 2 * i + 1].set(1.0)

    # causal additive mask (per-batch, used by the reference)
    mask = jnp.where(jnp.tril(jnp.ones((S, S), bool)), 0.0, -1e9).astype(jnp.float32)
    return cos_e, sin_e, swap, mask


if __name__ == "__main__":
    key = jax.random.PRNGKey(0)
    kx, kp = jax.random.split(key)

    x = jax.random.normal(kx, (B, S, D), dtype=jnp.float32)
    params = make_params(kp)
    cos_e, sin_e, swap, causal_mask = make_rope_and_mask()

    # one-time parameter fusion (hoisted out of the forward path)
    fused = fuse_params(params, cos_e, sin_e, swap)
    fused = tuple(jax.block_until_ready(f) for f in fused)

    out = jax.block_until_ready(block_forward(x, fused))

    ref = jax.block_until_ready(block_reference(x, params, cos_e, sin_e, swap, causal_mask))
    assert out.shape == (B, S, D)
    assert bool(jnp.allclose(out, ref, atol=2e-2, rtol=2e-2)), "mismatch vs JAX reference"

    print("KERNEL_OK")
</pallas_src>

<mosaic_0001>
module attributes {stable_mosaic.version = 11 : i64} {
  func.func @block_kernel(%arg0: memref<16x32xf32, #tpu.memory_space<vmem>>, %arg1: memref<1x96xf32, #tpu.memory_space<vmem>>, %arg2: memref<16x32xf32, #tpu.memory_space<vmem>>, %arg3: memref<16x16xf32, #tpu.memory_space<vmem>>, %arg4: memref<32x40xf32, #tpu.memory_space<vmem>>, %arg5: memref<16x64xf32, #tpu.memory_space<vmem>>, %arg6: memref<16x32xf32, #tpu.memory_space<vmem>>, %arg7: memref<4x16x32xf32, #tpu.memory_space<vmem>>, %arg8: memref<32x128xf32, #tpu.memory_space<vmem>>, %arg9: memref<64x32xf32, #tpu.memory_space<vmem>>, %arg10: memref<16x32xf32, #tpu.memory_space<vmem>>) attributes {dimension_semantics = [], scalar_prefetch = 0 : i64, scratch_operands = 0 : i64, tpu.core_type = #tpu.core_type<tc>} {
    %c0 = arith.constant 0 : index
    %c0_0 = arith.constant 0 : index
    %0 = vector.load %arg0[%c0, %c0_0] : memref<16x32xf32, #tpu.memory_space<vmem>>, vector<16x32xf32>
    %c0_1 = arith.constant 0 : index
    %c0_2 = arith.constant 0 : index
    %1 = vector.load %arg1[%c0_1, %c0_2] : memref<1x96xf32, #tpu.memory_space<vmem>>, vector<1x96xf32>
    %c0_3 = arith.constant 0 : index
    %c0_4 = arith.constant 0 : index
    %2 = vector.load %arg2[%c0_3, %c0_4] : memref<16x32xf32, #tpu.memory_space<vmem>>, vector<16x32xf32>
    %c0_5 = arith.constant 0 : index
    %c0_6 = arith.constant 0 : index
    %3 = vector.load %arg3[%c0_5, %c0_6] : memref<16x16xf32, #tpu.memory_space<vmem>>, vector<16x16xf32>
    %4 = vector.extract_strided_slice %1 {offsets = [0, 0], sizes = [1, 32], strides = [1, 1]} : vector<1x96xf32> to vector<1x32xf32>
    %5 = vector.extract_strided_slice %1 {offsets = [0, 32], sizes = [1, 32], strides = [1, 1]} : vector<1x96xf32> to vector<1x32xf32>
    %6 = vector.extract_strided_slice %1 {offsets = [0, 64], sizes = [1, 16], strides = [1, 1]} : vector<1x96xf32> to vector<1x16xf32>
    %7 = vector.extract_strided_slice %1 {offsets = [0, 80], sizes = [1, 16], strides = [1, 1]} : vector<1x96xf32> to vector<1x16xf32>
    %8 = vector.extract_strided_slice %2 {offsets = [0, 0], sizes = [16, 16], strides = [1, 1]} : vector<16x32xf32> to vector<16x16xf32>
    %9 = vector.extract_strided_slice %2 {offsets = [0, 16], sizes = [16, 16], strides = [1, 1]} : vector<16x32xf32> to vector<16x16xf32>
    %10 = vector.extract_strided_slice %2 {offsets = [0, 0], sizes = [16, 4], strides = [1, 1]} : vector<16x32xf32> to vector<16x4xf32>
    %11 = vector.extract_strided_slice %2 {offsets = [0, 16], sizes = [16, 4], strides = [1, 1]} : vector<16x32xf32> to vector<16x4xf32>
    %12 = arith.mulf %0, %0 : vector<16x32xf32>
    %cst = arith.constant dense<0.000000e+00> : vector<16xf32>
    %13 = vector.multi_reduction <add>, %12, %cst [1] : vector<16x32xf32> to vector<16xf32>
    %14 = vector.shape_cast %13 : vector<16xf32> to vector<16x1xf32>
    %cst_7 = arith.constant 3.200000e+01 : f32
    %15 = vector.broadcast %cst_7 : f32 to vector<16x1xf32>
    %16 = arith.divf %14, %15 : vector<16x1xf32>
    %cst_8 = arith.constant 9.99999997E-7 : f32
    %17 = vector.broadcast %cst_8 : f32 to vector<16x1xf32>
    %18 = arith.addf %16, %17 : vector<16x1xf32>
    %19 = math.rsqrt %18 : vector<16x1xf32>
    %20 = vector.broadcast %19 : vector<16x1xf32> to vector<16x32xf32>
    %21 = arith.mulf %0, %20 : vector<16x32xf32>
    %22 = vector.broadcast %4 : vector<1x32xf32> to vector<16x32xf32>
    %23 = arith.mulf %21, %22 : vector<16x32xf32>
    %c0_9 = arith.constant 0 : index
    %c0_10 = arith.constant 0 : index
    %24 = vector.load %arg4[%c0_9, %c0_10] : memref<32x40xf32, #tpu.memory_space<vmem>>, vector<32x40xf32>
    %cst_11 = arith.constant dense<0.000000e+00> : vector<16x40xf32>
    %25 = tpu.matmul %23, %24, %cst_11 {dimension_numbers = #tpu.dot_dimension_numbers<[1], [0], [0], [1], [0, 0, 1, 1], [], []>} : vector<16x32xf32>, vector<32x40xf32>, vector<16x40xf32> -> vector<16x40xf32>
    %26 = vector.extract_strided_slice %25 {offsets = [0, 0], sizes = [16, 16], strides = [1, 1]} : vector<16x40xf32> to vector<16x16xf32>
    %27 = arith.mulf %26, %26 : vector<16x16xf32>
    %cst_12 = arith.constant dense<0.000000e+00> : vector<16xf32>
    %28 = vector.multi_reduction <add>, %27, %cst_12 [1] : vector<16x16xf32> to vector<16xf32>
    %29 = vector.shape_cast %28 : vector<16xf32> to vector<16x1xf32>
    %cst_13 = arith.constant 1.600000e+01 : f32
    %30 = vector.broadcast %cst_13 : f32 to vector<16x1xf32>
    %31 = arith.divf %29, %30 : vector<16x1xf32>
    %cst_14 = arith.constant 9.99999997E-7 : f32
    %32 = vector.broadcast %cst_14 : f32 to vector<16x1xf32>
    %33 = arith.addf %31, %32 : vector<16x1xf32>
    %34 = math.rsqrt %33 : vector<16x1xf32>
    %35 = vector.broadcast %34 : vector<16x1xf32> to vector<16x16xf32>
    %36 = arith.mulf %26, %35 : vector<16x16xf32>
    %37 = vector.broadcast %6 : vector<1x16xf32> to vector<16x16xf32>
    %38 = arith.mulf %36, %37 : vector<16x16xf32>
    %39 = vector.extract_strided_slice %25 {offsets = [0, 16], sizes = [16, 16], strides = [1, 1]} : vector<16x40xf32> to vector<16x16xf32>
    %40 = arith.mulf %39, %39 : vector<16x16xf32>
    %cst_15 = arith.constant dense<0.000000e+00> : vector<16xf32>
    %41 = vector.multi_reduction <add>, %40, %cst_15 [1] : vector<16x16xf32> to vector<16xf32>
    %42 = vector.shape_cast %41 : vector<16xf32> to vector<16x1xf32>
    %cst_16 = arith.constant 1.600000e+01 : f32
    %43 = vector.broadcast %cst_16 : f32 to vector<16x1xf32>
    %44 = arith.divf %42, %43 : vector<16x1xf32>
    %cst_17 = arith.constant 9.99999997E-7 : f32
    %45 = vector.broadcast %cst_17 : f32 to vector<16x1xf32>
    %46 = arith.addf %44, %45 : vector<16x1xf32>
    %47 = math.rsqrt %46 : vector<16x1xf32>
    %48 = vector.broadcast %47 : vector<16x1xf32> to vector<16x16xf32>
    %49 = arith.mulf %39, %48 : vector<16x16xf32>
    %50 = vector.broadcast %7 : vector<1x16xf32> to vector<16x16xf32>
    %51 = arith.mulf %49, %50 : vector<16x16xf32>
    %52 = vector.extract_strided_slice %25 {offsets = [0, 32], sizes = [16, 4], strides = [1, 1]} : vector<16x40xf32> to vector<16x4xf32>
    %53 = arith.mulf %52, %10 : vector<16x4xf32>
    %54 = vector.extract_strided_slice %25 {offsets = [0, 36], sizes = [16, 4], strides = [1, 1]} : vector<16x40xf32> to vector<16x4xf32>
    %55 = arith.mulf %54, %11 : vector<16x4xf32>
    %56 = arith.addf %53, %55 : vector<16x4xf32>
    %c0_18 = arith.constant 0 : index
    %c0_19 = arith.constant 0 : index
    %57 = vector.load %arg5[%c0_18, %c0_19] : memref<16x64xf32, #tpu.memory_space<vmem>>, vector<16x64xf32>
    %cst_20 = arith.constant dense<0.000000e+00> : vector<16x64xf32>
    %58 = tpu.matmul %38, %57, %cst_20 {dimension_numbers = #tpu.dot_dimension_numbers<[1], [0], [0], [1], [0, 0, 1, 1], [], []>} : vector<16x16xf32>, vector<16x64xf32>, vector<16x64xf32> -> vector<16x64xf32>
    %59 = vector.extract_strided_slice %58 {offsets = [0, 0], sizes = [16, 32], strides = [1, 1]} : vector<16x64xf32> to vector<16x32xf32>
    %60 = vector.extract_strided_slice %58 {offsets = [0, 32], sizes = [16, 16], strides = [1, 1]} : vector<16x64xf32> to vector<16x16xf32>
    %61 = arith.mulf %60, %8 : vector<16x16xf32>
    %62 = vector.extract_strided_slice %58 {offsets = [0, 48], sizes = [16, 16], strides = [1, 1]} : vector<16x64xf32> to vector<16x16xf32>
    %63 = arith.mulf %62, %9 : vector<16x16xf32>
    %64 = arith.addf %61, %63 : vector<16x16xf32>
    %c0_21 = arith.constant 0 : index
    %c0_22 = arith.constant 0 : index
    %65 = vector.load %arg6[%c0_21, %c0_22] : memref<16x32xf32, #tpu.memory_space<vmem>>, vector<16x32xf32>
    %cst_23 = arith.constant dense<0.000000e+00> : vector<16x32xf32>
    %66 = tpu.matmul %51, %65, %cst_23 {dimension_numbers = #tpu.dot_dimension_numbers<[1], [0], [0], [1], [0, 0, 1, 1], [], []>} : vector<16x16xf32>, vector<16x32xf32>, vector<16x32xf32> -> vector<16x32xf32>
    %cst_24 = arith.constant 0.000000e+00 : f32
    %67 = vector.broadcast %cst_24 : f32 to vector<16x32xf32>
    %68 = vector.extract_strided_slice %59 {offsets = [0, 0], sizes = [16, 8], strides = [1, 1]} : vector<16x32xf32> to vector<16x8xf32>
    %69 = vector.extract_strided_slice %66 {offsets = [0, 0], sizes = [16, 8], strides = [1, 1]} : vector<16x32xf32> to vector<16x8xf32>
    %70 = vector.extract_strided_slice %64 {offsets = [0, 0], sizes = [16, 4], strides = [1, 1]} : vector<16x16xf32> to vector<16x4xf32>
    %cst_25 = arith.constant dense<0.000000e+00> : vector<16x16xf32>
    %71 = tpu.matmul %68, %69, %cst_25 {dimension_numbers = #tpu.dot_dimension_numbers<[1], [1], [0], [0], [0, 0, 1, 0], [], []>} : vector<16x8xf32>, vector<16x8xf32>, vector<16x16xf32> -> vector<16x16xf32>
    %cst_26 = arith.constant dense<0.000000e+00> : vector<16x16xf32>
    %72 = tpu.matmul %70, %56, %cst_26 {dimension_numbers = #tpu.dot_dimension_numbers<[1], [1], [0], [0], [0, 0, 1, 0], [], []>} : vector<16x4xf32>, vector<16x4xf32>, vector<16x16xf32> -> vector<16x16xf32>
    %73 = arith.addf %71, %72 : vector<16x16xf32>
    %74 = arith.addf %73, %3 : vector<16x16xf32>
    %cst_27 = arith.constant dense<0xFF800000> : vector<16xf32>
    %75 = vector.multi_reduction <maximumf>, %74, %cst_27 [1] : vector<16x16xf32> to vector<16xf32>
    %76 = vector.shape_cast %75 : vector<16xf32> to vector<16x1xf32>
    %77 = vector.broadcast %76 : vector<16x1xf32> to vector<16x16xf32>
    %78 = arith.subf %74, %77 : vector<16x16xf32>
    %79 = math.exp %78 : vector<16x16xf32>
    %cst_28 = arith.constant dense<0.000000e+00> : vector<16xf32>
    %80 = vector.multi_reduction <add>, %79, %cst_28 [1] : vector<16x16xf32> to vector<16xf32>
    %81 = vector.shape_cast %80 : vector<16xf32> to vector<16x1xf32>
    %82 = tpu.reciprocal %81 {approx = true} : vector<16x1xf32> -> vector<16x1xf32>
    %83 = vector.broadcast %82 : vector<16x1xf32> to vector<16x16xf32>
    %84 = arith.mulf %79, %83 : vector<16x16xf32>
    %c0_29 = arith.constant 0 : index
    %c0_30 = arith.constant 0 : index
    %c0_31 = arith.constant 0 : index
    %85 = vector.load %arg7[%c0_29, %c0_30, %c0_31] : memref<4x16x32xf32, #tpu.memory_space<vmem>>, vector<1x16x32xf32>
    %86 = vector.shape_cast %85 : vector<1x16x32xf32> to vector<16x32xf32>
    %cst_32 = arith.constant dense<0.000000e+00> : vector<16x32xf32>
    %87 = tpu.matmul %51, %86, %cst_32 {dimension_numbers = #tpu.dot_dimension_numbers<[1], [0], [0], [1], [0, 0, 1, 1], [], []>} : vector<16x16xf32>, vector<16x32xf32>, vector<16x32xf32> -> vector<16x32xf32>
    %cst_33 = arith.constant dense<0.000000e+00> : vector<16x32xf32>
    %88 = tpu.matmul %84, %87, %cst_33 {dimension_numbers = #tpu.dot_dimension_numbers<[1], [0], [0], [1], [0, 0, 1, 1], [], []>} : vector<16x16xf32>, vector<16x32xf32>, vector<16x32xf32> -> vector<16x32xf32>
    %89 = arith.addf %67, %88 : vector<16x32xf32>
    %90 = vector.extract_strided_slice %59 {offsets = [0, 8], sizes = [16, 8], strides = [1, 1]} : vector<16x32xf32> to vector<16x8xf32>
    %91 = vector.extract_strided_slice %66 {offsets = [0, 8], sizes = [16, 8], strides = [1, 1]} : vector<16x32xf32> to vector<16x8xf32>
    %92 = vector.extract_strided_slice %64 {offsets = [0, 4], sizes = [16, 4], strides = [1, 1]} : vector<16x16xf32> to vector<16x4xf32>
    %cst_34 = arith.constant dense<0.000000e+00> : vector<16x16xf32>
    %93 = tpu.matmul %90, %91, %cst_34 {dimension_numbers = #tpu.dot_dimension_numbers<[1], [1], [0], [0], [0, 0, 1, 0], [], []>} : vector<16x8xf32>, vector<16x8xf32>, vector<16x16xf32> -> vector<16x16xf32>
    %cst_35 = arith.constant dense<0.000000e+00> : vector<16x16xf32>
    %94 = tpu.matmul %92, %56, %cst_35 {dimension_numbers = #tpu.dot_dimension_numbers<[1], [1], [0], [0], [0, 0, 1, 0], [], []>} : vector<16x4xf32>, vector<16x4xf32>, vector<16x16xf32> -> vector<16x16xf32>
    %95 = arith.addf %93, %94 : vector<16x16xf32>
    %96 = arith.addf %95, %3 : vector<16x16xf32>
    %cst_36 = arith.constant dense<0xFF800000> : vector<16xf32>
    %97 = vector.multi_reduction <maximumf>, %96, %cst_36 [1] : vector<16x16xf32> to vector<16xf32>
    %98 = vector.shape_cast %97 : vector<16xf32> to vector<16x1xf32>
    %99 = vector.broadcast %98 : vector<16x1xf32> to vector<16x16xf32>
    %100 = arith.subf %96, %99 : vector<16x16xf32>
    %101 = math.exp %100 : vector<16x16xf32>
    %cst_37 = arith.constant dense<0.000000e+00> : vector<16xf32>
    %102 = vector.multi_reduction <add>, %101, %cst_37 [1] : vector<16x16xf32> to vector<16xf32>
    %103 = vector.shape_cast %102 : vector<16xf32> to vector<16x1xf32>
    %104 = tpu.reciprocal %103 {approx = true} : vector<16x1xf32> -> vector<16x1xf32>
    %105 = vector.broadcast %104 : vector<16x1xf32> to vector<16x16xf32>
    %106 = arith.mulf %101, %105 : vector<16x16xf32>
    %c1 = arith.constant 1 : index
    %c0_38 = arith.constant 0 : index
    %c0_39 = arith.constant 0 : index
    %107 = vector.load %arg7[%c1, %c0_38, %c0_39] : memref<4x16x32xf32, #tpu.memory_space<vmem>>, vector<1x16x32xf32>
    %108 = vector.shape_cast %107 : vector<1x16x32xf32> to vector<16x32xf32>
    %cst_40 = arith.constant dense<0.000000e+00> : vector<16x32xf32>
    %109 = tpu.matmul %51, %108, %cst_40 {dimension_numbers = #tpu.dot_dimension_numbers<[1], [0], [0], [1], [0, 0, 1, 1], [], []>} : vector<16x16xf32>, vector<16x32xf32>, vector<16x32xf32> -> vector<16x32xf32>
    %cst_41 = arith.constant dense<0.000000e+00> : vector<16x32xf32>
    %110 = tpu.matmul %106, %109, %cst_41 {dimension_numbers = #tpu.dot_dimension_numbers<[1], [0], [0], [1], [0, 0, 1, 1], [], []>} : vector<16x16xf32>, vector<16x32xf32>, vector<16x32xf32> -> vector<16x32xf32>
    %111 = arith.addf %89, %110 : vector<16x32xf32>
    %112 = vector.extract_strided_slice %59 {offsets = [0, 16], sizes = [16, 8], strides = [1, 1]} : vector<16x32xf32> to vector<16x8xf32>
    %113 = vector.extract_strided_slice %66 {offsets = [0, 16], sizes = [16, 8], strides = [1, 1]} : vector<16x32xf32> to vector<16x8xf32>
    %114 = vector.extract_strided_slice %64 {offsets = [0, 8], sizes = [16, 4], strides = [1, 1]} : vector<16x16xf32> to vector<16x4xf32>
    %cst_42 = arith.constant dense<0.000000e+00> : vector<16x16xf32>
    %115 = tpu.matmul %112, %113, %cst_42 {dimension_numbers = #tpu.dot_dimension_numbers<[1], [1], [0], [0], [0, 0, 1, 0], [], []>} : vector<16x8xf32>, vector<16x8xf32>, vector<16x16xf32> -> vector<16x16xf32>
    %cst_43 = arith.constant dense<0.000000e+00> : vector<16x16xf32>
    %116 = tpu.matmul %114, %56, %cst_43 {dimension_numbers = #tpu.dot_dimension_numbers<[1], [1], [0], [0], [0, 0, 1, 0], [], []>} : vector<16x4xf32>, vector<16x4xf32>, vector<16x16xf32> -> vector<16x16xf32>
    %117 = arith.addf %115, %116 : vector<16x16xf32>
    %118 = arith.addf %117, %3 : vector<16x16xf32>
    %cst_44 = arith.constant dense<0xFF800000> : vector<16xf32>
    %119 = vector.multi_reduction <maximumf>, %118, %cst_44 [1] : vector<16x16xf32> to vector<16xf32>
    %120 = vector.shape_cast %119 : vector<16xf32> to vector<16x1xf32>
    %121 = vector.broadcast %120 : vector<16x1xf32> to vector<16x16xf32>
    %122 = arith.subf %118, %121 : vector<16x16xf32>
    %123 = math.exp %122 : vector<16x16xf32>
    %cst_45 = arith.constant dense<0.000000e+00> : vector<16xf32>
    %124 = vector.multi_reduction <add>, %123, %cst_45 [1] : vector<16x16xf32> to vector<16xf32>
    %125 = vector.shape_cast %124 : vector<16xf32> to vector<16x1xf32>
    %126 = tpu.reciprocal %125 {approx = true} : vector<16x1xf32> -> vector<16x1xf32>
    %127 = vector.broadcast %126 : vector<16x1xf32> to vector<16x16xf32>
    %128 = arith.mulf %123, %127 : vector<16x16xf32>
    %c2 = arith.constant 2 : index
    %c0_46 = arith.constant 0 : index
    %c0_47 = arith.constant 0 : index
    %129 = vector.load %arg7[%c2, %c0_46, %c0_47] : memref<4x16x32xf32, #tpu.memory_space<vmem>>, vector<1x16x32xf32>
    %130 = vector.shape_cast %129 : vector<1x16x32xf32> to vector<16x32xf32>
    %cst_48 = arith.constant dense<0.000000e+00> : vector<16x32xf32>
    %131 = tpu.matmul %51, %130, %cst_48 {dimension_numbers = #tpu.dot_dimension_numbers<[1], [0], [0], [1], [0, 0, 1, 1], [], []>} : vector<16x16xf32>, vector<16x32xf32>, vector<16x32xf32> -> vector<16x32xf32>
    %cst_49 = arith.constant dense<0.000000e+00> : vector<16x32xf32>
    %132 = tpu.matmul %128, %131, %cst_49 {dimension_numbers = #tpu.dot_dimension_numbers<[1], [0], [0], [1], [0, 0, 1, 1], [], []>} : vector<16x16xf32>, vector<16x32xf32>, vector<16x32xf32> -> vector<16x32xf32>
    %133 = arith.addf %111, %132 : vector<16x32xf32>
    %134 = vector.extract_strided_slice %59 {offsets = [0, 24], sizes = [16, 8], strides = [1, 1]} : vector<16x32xf32> to vector<16x8xf32>
    %135 = vector.extract_strided_slice %66 {offsets = [0, 24], sizes = [16, 8], strides = [1, 1]} : vector<16x32xf32> to vector<16x8xf32>
    %136 = vector.extract_strided_slice %64 {offsets = [0, 12], sizes = [16, 4], strides = [1, 1]} : vector<16x16xf32> to vector<16x4xf32>
    %cst_50 = arith.constant dense<0.000000e+00> : vector<16x16xf32>
    %137 = tpu.matmul %134, %135, %cst_50 {dimension_numbers = #tpu.dot_dimension_numbers<[1], [1], [0], [0], [0, 0, 1, 0], [], []>} : vector<16x8xf32>, vector<16x8xf32>, vector<16x16xf32> -> vector<16x16xf32>
    %cst_51 = arith.constant dense<0.000000e+00> : vector<16x16xf32>
    %138 = tpu.matmul %136, %56, %cst_51 {dimension_numbers = #tpu.dot_dimension_numbers<[1], [1], [0], [0], [0, 0, 1, 0], [], []>} : vector<16x4xf32>, vector<16x4xf32>, vector<16x16xf32> -> vector<16x16xf32>
    %139 = arith.addf %137, %138 : vector<16x16xf32>
    %140 = arith.addf %139, %3 : vector<16x16xf32>
    %cst_52 = arith.constant dense<0xFF800000> : vector<16xf32>
    %141 = vector.multi_reduction <maximumf>, %140, %cst_52 [1] : vector<16x16xf32> to vector<16xf32>
    %142 = vector.shape_cast %141 : vector<16xf32> to vector<16x1xf32>
    %143 = vector.broadcast %142 : vector<16x1xf32> to vector<16x16xf32>
    %144 = arith.subf %140, %143 : vector<16x16xf32>
    %145 = math.exp %144 : vector<16x16xf32>
    %cst_53 = arith.constant dense<0.000000e+00> : vector<16xf32>
    %146 = vector.multi_reduction <add>, %145, %cst_53 [1] : vector<16x16xf32> to vector<16xf32>
    %147 = vector.shape_cast %146 : vector<16xf32> to vector<16x1xf32>
    %148 = tpu.reciprocal %147 {approx = true} : vector<16x1xf32> -> vector<16x1xf32>
    %149 = vector.broadcast %148 : vector<16x1xf32> to vector<16x16xf32>
    %150 = arith.mulf %145, %149 : vector<16x16xf32>
    %c3 = arith.constant 3 : index
    %c0_54 = arith.constant 0 : index
    %c0_55 = arith.constant 0 : index
    %151 = vector.load %arg7[%c3, %c0_54, %c0_55] : memref<4x16x32xf32, #tpu.memory_space<vmem>>, vector<1x16x32xf32>
    %152 = vector.shape_cast %151 : vector<1x16x32xf32> to vector<16x32xf32>
    %cst_56 = arith.constant dense<0.000000e+00> : vector<16x32xf32>
    %153 = tpu.matmul %51, %152, %cst_56 {dimension_numbers = #tpu.dot_dimension_numbers<[1], [0], [0], [1], [0, 0, 1, 1], [], []>} : vector<16x16xf32>, vector<16x32xf32>, vector<16x32xf32> -> vector<16x32xf32>
    %cst_57 = arith.constant dense<0.000000e+00> : vector<16x32xf32>
    %154 = tpu.matmul %150, %153, %cst_57 {dimension_numbers = #tpu.dot_dimension_numbers<[1], [0], [0], [1], [0, 0, 1, 1], [], []>} : vector<16x16xf32>, vector<16x32xf32>, vector<16x32xf32> -> vector<16x32xf32>
    %155 = arith.addf %133, %154 : vector<16x32xf32>
    %156 = arith.addf %0, %155 : vector<16x32xf32>
    %157 = arith.mulf %156, %156 : vector<16x32xf32>
    %cst_58 = arith.constant dense<0.000000e+00> : vector<16xf32>
    %158 = vector.multi_reduction <add>, %157, %cst_58 [1] : vector<16x32xf32> to vector<16xf32>
    %159 = vector.shape_cast %158 : vector<16xf32> to vector<16x1xf32>
    %cst_59 = arith.constant 3.200000e+01 : f32
    %160 = vector.broadcast %cst_59 : f32 to vector<16x1xf32>
    %161 = arith.divf %159, %160 : vector<16x1xf32>
    %cst_60 = arith.constant 9.99999997E-7 : f32
    %162 = vector.broadcast %cst_60 : f32 to vector<16x1xf32>
    %163 = arith.addf %161, %162 : vector<16x1xf32>
    %164 = math.rsqrt %163 : vector<16x1xf32>
    %165 = vector.broadcast %164 : vector<16x1xf32> to vector<16x32xf32>
    %166 = arith.mulf %156, %165 : vector<16x32xf32>
    %167 = vector.broadcast %5 : vector<1x32xf32> to vector<16x32xf32>
    %168 = arith.mulf %166, %167 : vector<16x32xf32>
    %c0_61 = arith.constant 0 : index
    %c0_62 = arith.constant 0 : index
    %169 = vector.load %arg8[%c0_61, %c0_62] : memref<32x128xf32, #tpu.memory_space<vmem>>, vector<32x128xf32>
    %cst_63 = arith.constant dense<0.000000e+00> : vector<16x128xf32>
    %170 = tpu.matmul %168, %169, %cst_63 {dimension_numbers = #tpu.dot_dimension_numbers<[1], [0], [0], [1], [0, 0, 1, 1], [], []>} : vector<16x32xf32>, vector<32x128xf32>, vector<16x128xf32> -> vector<16x128xf32>
    %171 = vector.extract_strided_slice %170 {offsets = [0, 0], sizes = [16, 64], strides = [1, 1]} : vector<16x128xf32> to vector<16x64xf32>
    %172 = arith.negf %171 : vector<16x64xf32>
    %173 = math.exp %172 : vector<16x64xf32>
    %cst_64 = arith.constant 1.000000e+00 : f32
    %174 = vector.broadcast %cst_64 : f32 to vector<16x64xf32>
    %175 = arith.addf %174, %173 : vector<16x64xf32>
    %176 = arith.divf %174, %175 : vector<16x64xf32>
    %177 = arith.mulf %171, %176 : vector<16x64xf32>
    %178 = vector.extract_strided_slice %170 {offsets = [0, 64], sizes = [16, 64], strides = [1, 1]} : vector<16x128xf32> to vector<16x64xf32>
    %179 = arith.mulf %177, %178 : vector<16x64xf32>
    %c0_65 = arith.constant 0 : index
    %c0_66 = arith.constant 0 : index
    %180 = vector.load %arg9[%c0_65, %c0_66] : memref<64x32xf32, #tpu.memory_space<vmem>>, vector<64x32xf32>
    %cst_67 = arith.constant dense<0.000000e+00> : vector<16x32xf32>
    %181 = tpu.matmul %179, %180, %cst_67 {dimension_numbers = #tpu.dot_dimension_numbers<[1], [0], [0], [1], [0, 0, 1, 1], [], []>} : vector<16x64xf32>, vector<64x32xf32>, vector<16x32xf32> -> vector<16x32xf32>
    %182 = arith.addf %156, %181 : vector<16x32xf32>
    %c0_68 = arith.constant 0 : index
    %c0_69 = arith.constant 0 : index
    %183 = vector.load %arg10[%c0_68, %c0_69] : memref<16x32xf32, #tpu.memory_space<vmem>>, vector<16x32xf32>
    tpu.vector_store %arg10[%c0_68, %c0_69], %182 {strides = array<i32>} : memref<16x32xf32, #tpu.memory_space<vmem>>, vector<16x32xf32>,
    return
  }
}

</mosaic_0001>

<llo_original>
// kernel: tpu_custom_call.1
$region0: #{tpu_custom_call.1}
  #allocation0 [shape = 'u32[]', space=smem, size = 0x4, offset = 0x4, fixed_abs, tag = 'smem constant byte address 0x4 - core index']
  #allocation1 [shape = 'u32[144,128]{1,0:T(1,128)}', space=vmem, size = 0x12000, scoped, tag = 'internal scratch']
  %s0 = inlined_call_operand.hbm [shape: f32[16,32], index: 0, kind: input, shape index: {}]
  %s1 = inlined_call_operand.vmem [shape: f32[1,96], index: 1, kind: input, shape index: {}]
  %s2 = inlined_call_operand.hbm [shape: f32[16,32], index: 2, kind: input, shape index: {}]
  %s3 = inlined_call_operand.hbm [shape: f32[16,16], index: 3, kind: input, shape index: {}]
  %s4 = inlined_call_operand.vmem [shape: f32[32,40], index: 4, kind: input, shape index: {}]
  %s5 = inlined_call_operand.hbm [shape: f32[16,64], index: 5, kind: input, shape index: {}]
  %s6 = inlined_call_operand.hbm [shape: f32[16,32], index: 6, kind: input, shape index: {}]
  %s7 = inlined_call_operand.vmem [shape: f32[4,16,32], index: 7, kind: input, shape index: {}]
  %s8 = inlined_call_operand.hbm [shape: f32[32,128], index: 8, kind: input, shape index: {}]
  %s9 = inlined_call_operand.vmem [shape: f32[64,32], index: 9, kind: input, shape index: {}]
  %s10 = inlined_call_operand.hbm [shape: f32[16,32], index: 10, kind: output, shape index: {}]
  %s11 = sld [smem:[#allocation0]]
  $region74: #{tpu_custom_call.1} parent=0
    _
  %s13 = ssub.s32 1, %s11
  %s14 = scalar_select 0, %s13, %s11
  $region1: #{tpu_custom_call.1} parent=0
    #allocation2 [shape = 'u8[8192]{0}', space=vmem, size = 0x2000, scoped, tag = 'input window, operand 0, single buffered']
    #allocation3 [shape = 's32[1]{0}', space=sflag, size = 0x4, scoped, tag = 'scoped memory for tpu_custom_call.1']
    #allocation4 [shape = 's32[1]{0}', space=sflag, size = 0x4, scoped, tag = 'scoped memory for tpu_custom_call.1']
    #allocation5 [shape = 'u8[8192]{0}', space=vmem, size = 0x2000, scoped, tag = 'input window, operand 2, single buffered']
    #allocation6 [shape = 's32[1]{0}', space=sflag, size = 0x4, scoped, tag = 'scoped memory for tpu_custom_call.1']
    #allocation7 [shape = 'u8[8192]{0}', space=vmem, size = 0x2000, scoped, tag = 'input window, operand 3, single buffered']
    #allocation8 [shape = 'u8[8192]{0}', space=vmem, size = 0x2000, scoped, tag = 'input window, operand 5, single buffered']
    #allocation9 [shape = 's32[1]{0}', space=sflag, size = 0x4, scoped, tag = 'scoped memory for tpu_custom_call.1']
    #allocation10 [shape = 'u8[8192]{0}', space=vmem, size = 0x2000, scoped, tag = 'input window, operand 6, single buffered']
    #allocation11 [shape = 'u8[16384]{0}', space=vmem, size = 0x4000, scoped, tag = 'input window, operand 8, single buffered']
    #allocation12 [shape = 's32[1]{0}', space=sflag, size = 0x4, scoped, tag = 'scoped memory for tpu_custom_call.1']
    #allocation13 [shape = 'u8[8192]{0}', space=vmem, size = 0x2000, scoped, tag = 'output window, operand 0, single buffered']
    %15 = vsyncpa [#allocation3], 0
    %16 = vsyncpa [#allocation6], 0
    %17 = vsyncpa [#allocation9], 0
    %18 = vsyncpa [#allocation12], 0
    %19 = vsyncpa [#allocation4], 0
    // Predicated region
    $region2: #{tpu_custom_call.1} parent=1 // pred_check
      _
    $region3: #{tpu_custom_call.1} parent=1 // pred_check_branch
      %21 = sbr.rel (0) target = $region5
    $region4: #{tpu_custom_call.1} parent=1 // pred_region
      %s23 = ssub.s32 256, 256
      %24 = vsyncadd [#allocation3], %s23
      %s25 = sshll.u32 [#allocation2], 4
      %s26 = int_to_ptr.vmem [resolvable:$true] %s25
      %31 = dma.hbm_to_vmem [thread:$0]  %s0, 256, %s26, [#allocation3], 128, 128, 8
    $region5: #{tpu_custom_call.1} parent=1 // pred_fallthru
      _
    // Predicated region
    $region6: #{tpu_custom_call.1} parent=1 // pred_check
      _
    $region7: #{tpu_custom_call.1} parent=1 // pred_check_branch
      %33 = sbr.rel (0) target = $region9
    $region8: #{tpu_custom_call.1} parent=1 // pred_region
      _
    $region9: #{tpu_custom_call.1} parent=1 // pred_fallthru
      _
    // Predicated region
    $region10: #{tpu_custom_call.1} parent=1 // pred_check
      _
    $region11: #{tpu_custom_call.1} parent=1 // pred_check_branch
      %35 = sbr.rel (0) target = $region13
    $region12: #{tpu_custom_call.1} parent=1 // pred_region
      %s37 = ssub.s32 256, 256
      %38 = vsyncadd [#allocation6], %s37
      %s39 = sshll.u32 [#allocation5], 4
      %s40 = int_to_ptr.vmem [resolvable:$true] %s39
      %45 = dma.hbm_to_vmem [thread:$0]  %s2, 256, %s40, [#allocation6], 128, 128, 8
    $region13: #{tpu_custom_call.1} parent=1 // pred_fallthru
      _
    // Predicated region
    $region14: #{tpu_custom_call.1} parent=1 // pred_check
      _
    $region15: #{tpu_custom_call.1} parent=1 // pred_check_branch
      %47 = sbr.rel (0) target = $region17
    $region16: #{tpu_custom_call.1} parent=1 // pred_region
      %s49 = ssub.s32 256, 256
      %50 = vsyncadd [#allocation6], %s49
      %s51 = sshll.u32 [#allocation7], 4
      %s52 = int_to_ptr.vmem [resolvable:$true] %s51
      %57 = dma.hbm_to_vmem [thread:$0]  %s3, 256, %s52, [#allocation6], 128, 128, 8
    $region17: #{tpu_custom_call.1} parent=1 // pred_fallthru
      _
    // Predicated region
    $region18: #{tpu_custom_call.1} parent=1 // pred_check
      _
    $region19: #{tpu_custom_call.1} parent=1 // pred_check_branch
      %59 = sbr.rel (0) target = $region21
    $region20: #{tpu_custom_call.1} parent=1 // pred_region
      _
    $region21: #{tpu_custom_call.1} parent=1 // pred_fallthru
      _
    // Predicated region
    $region22: #{tpu_custom_call.1} parent=1 // pred_check
      _
    $region23: #{tpu_custom_call.1} parent=1 // pred_check_branch
      %61 = sbr.rel (0) target = $region25
    $region24: #{tpu_custom_call.1} parent=1 // pred_region
      %s63 = ssub.s32 256, 256
      %64 = vsyncadd [#allocation9], %s63
      %s65 = sshll.u32 [#allocation8], 4
      %s66 = int_to_ptr.vmem [resolvable:$true] %s65
      %71 = dma.hbm_to_vmem [thread:$0]  %s5, 256, %s66, [#allocation9], 128, 128, 8
    $region25: #{tpu_custom_call.1} parent=1 // pred_fallthru
      _
    // Predicated region
    $region26: #{tpu_custom_call.1} parent=1 // pred_check
      _
    $region27: #{tpu_custom_call.1} parent=1 // pred_check_branch
      %73 = sbr.rel (0) target = $region29
    $region28: #{tpu_custom_call.1} parent=1 // pred_region
      %s75 = ssub.s32 256, 256
      %76 = vsyncadd [#allocation9], %s75
      %s77 = sshll.u32 [#allocation10], 4
      %s78 = int_to_ptr.vmem [resolvable:$true] %s77
      %83 = dma.hbm_to_vmem [thread:$0]  %s6, 256, %s78, [#allocation9], 128, 128, 8
    $region29: #{tpu_custom_call.1} parent=1 // pred_fallthru
      _
    // Predicated region
    $region30: #{tpu_custom_call.1} parent=1 // pred_check
      _
    $region31: #{tpu_custom_call.1} parent=1 // pred_check_branch
      %85 = sbr.rel (0) target = $region33
    $region32: #{tpu_custom_call.1} parent=1 // pred_region
      _
    $region33: #{tpu_custom_call.1} parent=1 // pred_fallthru
      _
    // Predicated region
    $region34: #{tpu_custom_call.1} parent=1 // pred_check
      _
    $region35: #{tpu_custom_call.1} parent=1 // pred_check_branch
      %87 = sbr.rel (0) target = $region37
    $region36: #{tpu_custom_call.1} parent=1 // pred_region
      %s89 = ssub.s32 512, 512
      %90 = vsyncadd [#allocation12], %s89
      %s91 = sshll.u32 [#allocation11], 4
      %s92 = int_to_ptr.vmem [resolvable:$true] %s91
      %97 = dma.hbm_to_vmem [thread:$0]  %s8, 512, %s92, [#allocation12], 128, 128, 8
    $region37: #{tpu_custom_call.1} parent=1 // pred_fallthru
      _
    // Predicated region
    $region38: #{tpu_custom_call.1} parent=1 // pred_check
      _
    $region39: #{tpu_custom_call.1} parent=1 // pred_check_branch
      %99 = sbr.rel (0) target = $region41
    $region40: #{tpu_custom_call.1} parent=1 // pred_region
      _
    $region41: #{tpu_custom_call.1} parent=1 // pred_fallthru
      _
    // Predicated region
    $region42: #{tpu_custom_call.1} parent=1 // pred_check
      _
    $region43: #{tpu_custom_call.1} parent=1 // pred_check_branch
      %101 = sbr.rel (0) target = $region45
    $region44: #{tpu_custom_call.1} parent=1 // pred_region
      %102 = dma.done [#allocation3], 256
    $region45: #{tpu_custom_call.1} parent=1 // pred_fallthru
      _
    // Predicated region
    $region46: #{tpu_custom_call.1} parent=1 // pred_check
      _
    $region47: #{tpu_custom_call.1} parent=1 // pred_check_branch
      %104 = sbr.rel (0) target = $region49
    $region48: #{tpu_custom_call.1} parent=1 // pred_region
      %105 = dma.done [#allocation6], 256
    $region49: #{tpu_custom_call.1} parent=1 // pred_fallthru
      _
    // Predicated region
    $region50: #{tpu_custom_call.1} parent=1 // pred_check
      _
    $region51: #{tpu_custom_call.1} parent=1 // pred_check_branch
      %107 = sbr.rel (0) target = $region53
    $region52: #{tpu_custom_call.1} parent=1 // pred_region
      %108 = dma.done [#allocation6], 256
    $region53: #{tpu_custom_call.1} parent=1 // pred_fallthru
      _
    // Predicated region
    $region54: #{tpu_custom_call.1} parent=1 // pred_check
      _
    $region55: #{tpu_custom_call.1} parent=1 // pred_check_branch
      %110 = sbr.rel (0) target = $region57
    $region56: #{tpu_custom_call.1} parent=1 // pred_region
      %111 = dma.done [#allocation9], 256
    $region57: #{tpu_custom_call.1} parent=1 // pred_fallthru
      _
    // Predicated region
    $region58: #{tpu_custom_call.1} parent=1 // pred_check
      _
    $region59: #{tpu_custom_call.1} parent=1 // pred_check_branch
      %113 = sbr.rel (0) target = $region61
    $region60: #{tpu_custom_call.1} parent=1 // pred_region
      %114 = dma.done [#allocation9], 256
    $region61: #{tpu_custom_call.1} parent=1 // pred_fallthru
      _
    // Predicated region
    $region62: #{tpu_custom_call.1} parent=1 // pred_check
      _
    $region63: #{tpu_custom_call.1} parent=1 // pred_check_branch
      %116 = sbr.rel (0) target = $region65
    $region64: #{tpu_custom_call.1} parent=1 // pred_region
      %117 = dma.done [#allocation12], 512
    $region65: #{tpu_custom_call.1} parent=1 // pred_fallthru
      _
    %v118 = vld [vmem:[#allocation2] sm:$0xff]
    %v119 = vld [vmem:[#allocation2 + $0x8] sm:$0xff]
    %v120 = vld [vmem:[%s1] sm:$0x1]
    %v121 = vld [vmem:[#allocation5] sm:$0xff]
    %v122 = vld [vmem:[#allocation5 + $0x8] sm:$0xff]
    %v123 = vld [vmem:[#allocation7] sm:$0xff]
    %v124 = vld [vmem:[#allocation7 + $0x8] sm:$0xff]
    %v125 = vmul.f32 %v118, %v118
    %v126 = vmul.f32 %v119, %v119
    %vm127 = vcmask 261120
    %v128 = vsel %vm127, %v125, 0.0
    %129 = vadd.xlane.f32.xlu0 %v128
    %v130 = vpop.xlane.xlu0 %129
    %v131 = vsel %vm127, %v126, 0.0
    %132 = vadd.xlane.f32.xlu0 %v131
    %v133 = vpop.xlane.xlu0 %132
    %v134 = vrcp.pop 32.0
    %v135 = vmul.f32 %v130, %v134
    %v136 = vmul.f32 %v133, %v134
    %v137 = vadd.f32 %v135, 1e-06
    %v138 = vadd.f32 %v136, 1e-06
    %v139 = vrsqrt.pop %v137
    %v140 = vrsqrt.pop %v138
    %v141 = vmul.f32 %v118, %v139
    %v142 = vmul.f32 %v119, %v140
    %v144 = vlaneseq
    %v145 = vshrl.u32 %v144, 7
    %v146 = vsub.s32 0, %v145
    %v147 = vrot.slane %v120, %v146
    %v149 = vmul.f32 %v141, %v147
    %v150 = vmul.f32 %v142, %v147
    %v151 = vld [vmem:[%s4] sm:$0xff]
    %v152 = vld [vmem:[%s4 + $0x8] sm:$0xff]
    %v153 = vld [vmem:[%s4 + $0x10] sm:$0xff]
    %v154 = vld [vmem:[%s4 + $0x18] sm:$0xff]
    %v156 = vsel %vm127, %v149, 0
    %v159 = vsel %vm127, %v150, 0
    %161 = vmatprep.subr.mxu0 0.0
    %162 = vmatpush1.msra.mxu0 %v151
    %163 = vmatprep.subr.mxu0 0.0
    %164 = vmatpush1.msra.mxu0 %v152
    %165 = vmatprep.subr.mxu0 0.0
    %166 = vmatpush1.msra.mxu0 %v153
    %167 = vmatprep.subr.mxu0 0.0
    %168 = vmatpush1.msra.mxu0 %v154
    %169 = vmatprep.subr.mxu0 0.0
    %170 = vmatpush1.msra.mxu0 0.0
    %171 = vmatprep.subr.mxu0 0.0
    %172 = vmatpush1.msra.mxu0 0.0
    %173 = vmatprep.subr.mxu0 0.0
    %174 = vmatpush1.msra.mxu0 0.0
    %175 = vmatprep.subr.mxu0 0.0
    %176 = vmatpush1.msra.mxu0 0.0
    %177 = vmatprep.subr.mxu0 0.0
    %178 = vmatpush1.msra.mxu0 0.0
    %179 = vmatprep.subr.mxu0 0.0
    %180 = vmatpush1.msra.mxu0 0.0
    %181 = vmatprep.subr.mxu0 0.0
    %182 = vmatpush1.msra.mxu0 0.0
    %183 = vmatprep.subr.mxu0 0.0
    %184 = vmatpush1.msra.mxu0 0.0
    %185 = vmatprep.subr.mxu0 0.0
    %186 = vmatpush1.msra.mxu0 0.0
    %187 = vmatprep.subr.mxu0 0.0
    %188 = vmatpush1.msra.mxu0 0.0
    %189 = vmatprep.subr.mxu0 0.0
    %190 = vmatpush1.msra.mxu0 0.0
    %191 = vmatprep.subr.mxu0 0.0
    %192 = vmatpush1.msra.mxu0 0.0
    %193 = vmatprep.subr.mxu0 0.0
    %194 = vmatpush1.msra.mxu0 0.0
    %195 = vmatprep.subr.mxu0 0.0
    %196 = vmatpush1.msra.mxu0 0.0
    %197 = vmatprep.subr.mxu0 0.0
    %198 = vmatpush1.msra.mxu0 0.0
    %199 = vmatprep.subr.mxu0 0.0
    %200 = vmatpush1.msra.mxu0 0.0
    %201 = vmatprep.subr.mxu0 0.0
    %202 = vmatpush1.msra.mxu0 0.0
    %203 = vmatprep.subr.mxu0 0.0
    %204 = vmatpush1.msra.mxu0 0.0
    %205 = vmatprep.subr.mxu0 0.0
    %206 = vmatpush1.msra.mxu0 0.0
    %207 = vmatprep.subr.mxu0 0.0
    %208 = vmatpush1.msra.mxu0 0.0
    %209 = vmatprep.subr.mxu0 0.0
    %210 = vmatpush1.msra.mxu0 0.0
    %211 = vmatprep.subr.mxu0 0.0
    %212 = vmatpush1.msra.mxu0 0.0
    %213 = vmatprep.subr.mxu0 0.0
    %214 = vmatpush1.msra.mxu0 0.0
    %215 = vmatprep.subr.mxu0 0.0
    %216 = vmatpush1.msra.mxu0 0.0
    %217 = vmatprep.subr.mxu0 0.0
    %218 = vmatpush1.msra.mxu0 0.0
    %219 = vmatprep.subr.mxu0 0.0
    %220 = vmatpush1.msra.mxu0 0.0
    %221 = vmatprep.subr.mxu0 0.0
    %222 = vmatpush1.msra.mxu0 0.0
    %223 = vmatprep.subr.mxu0 0.0
    %224 = vmatpush1.msra.mxu0 0.0
    %225 = vmatprep.mubr.f32.mxu0 0.0
    %226 = vmatmul.mubr.f32.gmra.mrb[0].mxu0 %v156
    %v227 = vpop.f32.mrb[0].mxu0
    %v228 = vadd.f32 0.0, %v227
    %v229 = vpop.f32.mrb[0].mxu0
    %230 = vmatprep.mubr.f32.mxu0 0.0
    %231 = vmatmul.mubr.f32.gmra.mrb[0].mxu0 %v159
    %v232 = vpop.f32.mrb[0].mxu0
    %v233 = vadd.f32 0.0, %v232
    %v234 = vpop.f32.mrb[0].mxu0
    %235 = vdwg.mxu0
    %v236 = vmul.f32 %v228, %v228
    %v237 = vmul.f32 %v233, %v233
    %vm238 = vcmask 130048
    %v239 = vsel %vm238, %v236, 0.0
    %240 = vadd.xlane.f32.xlu0 %v239
    %v241 = vpop.xlane.xlu0 %240
    %v242 = vsel %vm238, %v237, 0.0
    %243 = vadd.xlane.f32.xlu0 %v242
    %v244 = vpop.xlane.xlu0 %243
    %v245 = vrcp.pop 16.0
    %v246 = vmul.f32 %v241, %v245
    %v247 = vmul.f32 %v244, %v245
    %v248 = vadd.f32 %v246, 1e-06
    %v249 = vadd.f32 %v247, 1e-06
    %v250 = vrsqrt.pop %v248
    %v251 = vrsqrt.pop %v249
    %v252 = vmul.f32 %v228, %v250
    %v253 = vmul.f32 %v233, %v251
    %254 = vrot.lane.b32.xlu0 %v147, 64
    %v255 = vpop.permute.xlu0 %254
    %v257 = vmul.f32 %v252, %v255
    %v258 = vmul.f32 %v253, %v255
    %261 = vrot.lane.b32.xlu0 %v236, 112
    %v262 = vpop.permute.xlu0 %261
    %263 = vrot.lane.b32.xlu0 %v237, 112
    %v264 = vpop.permute.xlu0 %263
    %v267 = vsel %vm238, %v262, 0.0
    %268 = vadd.xlane.f32.xlu0 %v267
    %v269 = vpop.xlane.xlu0 %268
    %v270 = vsel %vm238, %v264, 0.0
    %271 = vadd.xlane.f32.xlu0 %v270
    %v272 = vpop.xlane.xlu0 %271
    %v273 = vmul.f32 %v269, %v245
    %v274 = vmul.f32 %v272, %v245
    %v275 = vadd.f32 %v273, 1e-06
    %v276 = vadd.f32 %v274, 1e-06
    %v277 = vrsqrt.pop %v275
    %v278 = vrsqrt.pop %v276
    %v279 = vmul.f32 %v228, %v277
    %v280 = vmul.f32 %v233, %v278
    %v281 = vmul.f32 %v279, %v255
    %v282 = vmul.f32 %v280, %v255
    %285 = vrot.lane.b32.xlu0 %v121, 32
    %v286 = vpop.permute.xlu0 %285
    %287 = vrot.lane.b32.xlu0 %v122, 32
    %v288 = vpop.permute.xlu0 %287
    %v291 = vmul.f32 %v228, %v286
    %v292 = vmul.f32 %v233, %v288
    %293 = vrot.lane.b32.xlu0 %v121, 20
    %v294 = vpop.permute.xlu0 %293
    %295 = vrot.lane.b32.xlu0 %v122, 20
    %v296 = vpop.permute.xlu0 %295
    %v299 = vmul.f32 %v228, %v294
    %v300 = vmul.f32 %v233, %v296
    %303 = vrot.lane.b32.xlu0 %v299, 124
    %v304 = vpop.permute.xlu0 %303
    %305 = vrot.lane.b32.xlu0 %v300, 124
    %v306 = vpop.permute.xlu0 %305
    %v309 = vadd.f32 %v291, %v304
    %v310 = vadd.f32 %v292, %v306
    %v311 = vld [vmem:[#allocation8] sm:$0xff]
    %v312 = vld [vmem:[#allocation8 + $0x8] sm:$0xff]
    %v314 = vsel %vm238, %v257, 0
    %v317 = vsel %vm238, %v258, 0
    %319 = vmatprep.subr.mxu0 0.0
    %320 = vmatpush1.msra.mxu0 %v311
    %321 = vmatprep.subr.mxu0 0.0
    %322 = vmatpush1.msra.mxu0 %v312
    %323 = vmatprep.subr.mxu0 0.0
    %324 = vmatpush1.msra.mxu0 0.0
    %325 = vmatprep.subr.mxu0 0.0
    %326 = vmatpush1.msra.mxu0 0.0
    %327 = vmatprep.subr.mxu0 0.0
    %328 = vmatpush1.msra.mxu0 0.0
    %329 = vmatprep.subr.mxu0 0.0
    %330 = vmatpush1.msra.mxu0 0.0
    %331 = vmatprep.subr.mxu0 0.0
    %332 = vmatpush1.msra.mxu0 0.0
    %333 = vmatprep.subr.mxu0 0.0
    %334 = vmatpush1.msra.mxu0 0.0
    %335 = vmatprep.subr.mxu0 0.0
    %336 = vmatpush1.msra.mxu0 0.0
    %337 = vmatprep.subr.mxu0 0.0
    %338 = vmatpush1.msra.mxu0 0.0
    %339 = vmatprep.subr.mxu0 0.0
    %340 = vmatpush1.msra.mxu0 0.0
    %341 = vmatprep.subr.mxu0 0.0
    %342 = vmatpush1.msra.mxu0 0.0
    %343 = vmatprep.subr.mxu0 0.0
    %344 = vmatpush1.msra.mxu0 0.0
    %345 = vmatprep.subr.mxu0 0.0
    %346 = vmatpush1.msra.mxu0 0.0
    %347 = vmatprep.subr.mxu0 0.0
    %348 = vmatpush1.msra.mxu0 0.0
    %349 = vmatprep.subr.mxu0 0.0
    %350 = vmatpush1.msra.mxu0 0.0
    %351 = vmatprep.subr.mxu0 0.0
    %352 = vmatpush1.msra.mxu0 0.0
    %353 = vmatprep.subr.mxu0 0.0
    %354 = vmatpush1.msra.mxu0 0.0
    %355 = vmatprep.subr.mxu0 0.0
    %356 = vmatpush1.msra.mxu0 0.0
    %357 = vmatprep.subr.mxu0 0.0
    %358 = vmatpush1.msra.mxu0 0.0
    %359 = vmatprep.subr.mxu0 0.0
    %360 = vmatpush1.msra.mxu0 0.0
    %361 = vmatprep.subr.mxu0 0.0
    %362 = vmatpush1.msra.mxu0 0.0
    %363 = vmatprep.subr.mxu0 0.0
    %364 = vmatpush1.msra.mxu0 0.0
    %365 = vmatprep.subr.mxu0 0.0
    %366 = vmatpush1.msra.mxu0 0.0
    %367 = vmatprep.subr.mxu0 0.0
    %368 = vmatpush1.msra.mxu0 0.0
    %369 = vmatprep.subr.mxu0 0.0
    %370 = vmatpush1.msra.mxu0 0.0
    %371 = vmatprep.subr.mxu0 0.0
    %372 = vmatpush1.msra.mxu0 0.0
    %373 = vmatprep.subr.mxu0 0.0
    %374 = vmatpush1.msra.mxu0 0.0
    %375 = vmatprep.subr.mxu0 0.0
    %376 = vmatpush1.msra.mxu0 0.0
    %377 = vmatprep.subr.mxu0 0.0
    %378 = vmatpush1.msra.mxu0 0.0
    %379 = vmatprep.subr.mxu0 0.0
    %380 = vmatpush1.msra.mxu0 0.0
    %381 = vmatprep.subr.mxu0 0.0
    %382 = vmatpush1.msra.mxu0 0.0
    %383 = vmatprep.mubr.f32.mxu0 0.0
    %384 = vmatmul.mubr.f32.gmra.mrb[0].mxu0 %v314
    %v385 = vpop.f32.mrb[0].mxu0
    %v386 = vadd.f32 0.0, %v385
    %v387 = vpop.f32.mrb[0].mxu0
    %388 = vmatprep.mubr.f32.mxu0 0.0
    %389 = vmatmul.mubr.f32.gmra.mrb[0].mxu0 %v317
    %v390 = vpop.f32.mrb[0].mxu0
    %v391 = vadd.f32 0.0, %v390
    %v392 = vpop.f32.mrb[0].mxu0
    %393 = vdwg.mxu0
    %v394 = vmul.f32 %v386, %v286
    %v395 = vmul.f32 %v391, %v288
    %398 = vrot.lane.b32.xlu0 %v394, 112
    %v399 = vpop.permute.xlu0 %398
    %400 = vrot.lane.b32.xlu0 %v395, 112
    %v401 = vpop.permute.xlu0 %400
    %v404 = vadd.f32 %v394, %v399
    %v405 = vadd.f32 %v395, %v401
    %v406 = vld [vmem:[#allocation10] sm:$0xff]
    %v407 = vld [vmem:[#allocation10 + $0x8] sm:$0xff]
    %410 = vrot.lane.b32.xlu0 %v281, 112
    %v411 = vpop.permute.xlu0 %410
    %412 = vrot.lane.b32.xlu0 %v282, 112
    %v413 = vpop.permute.xlu0 %412
    %v414 = vsel %vm238, %v411, 0
    %v416 = vsel %vm238, %v413, 0
    %418 = vmatprep.subr.mxu0 0.0
    %419 = vmatpush1.msra.mxu0 %v406
    %420 = vmatprep.subr.mxu0 0.0
    %421 = vmatpush1.msra.mxu0 %v407
    %422 = vmatprep.subr.mxu0 0.0
    %423 = vmatpush1.msra.mxu0 0.0
    %424 = vmatprep.subr.mxu0 0.0
    %425 = vmatpush1.msra.mxu0 0.0
    %426 = vmatprep.subr.mxu0 0.0
    %427 = vmatpush1.msra.mxu0 0.0
    %428 = vmatprep.subr.mxu0 0.0
    %429 = vmatpush1.msra.mxu0 0.0
    %430 = vmatprep.subr.mxu0 0.0
    %431 = vmatpush1.msra.mxu0 0.0
    %432 = vmatprep.subr.mxu0 0.0
    %433 = vmatpush1.msra.mxu0 0.0
    %434 = vmatprep.subr.mxu0 0.0
    %435 = vmatpush1.msra.mxu0 0.0
    %436 = vmatprep.subr.mxu0 0.0
    %437 = vmatpush1.msra.mxu0 0.0
    %438 = vmatprep.subr.mxu0 0.0
    %439 = vmatpush1.msra.mxu0 0.0
    %440 = vmatprep.subr.mxu0 0.0
    %441 = vmatpush1.msra.mxu0 0.0
    %442 = vmatprep.subr.mxu0 0.0
    %443 = vmatpush1.msra.mxu0 0.0
    %444 = vmatprep.subr.mxu0 0.0
    %445 = vmatpush1.msra.mxu0 0.0
    %446 = vmatprep.subr.mxu0 0.0
    %447 = vmatpush1.msra.mxu0 0.0
    %448 = vmatprep.subr.mxu0 0.0
    %449 = vmatpush1.msra.mxu0 0.0
    %450 = vmatprep.subr.mxu0 0.0
    %451 = vmatpush1.msra.mxu0 0.0
    %452 = vmatprep.subr.mxu0 0.0
    %453 = vmatpush1.msra.mxu0 0.0
    %454 = vmatprep.subr.mxu0 0.0
    %455 = vmatpush1.msra.mxu0 0.0
    %456 = vmatprep.subr.mxu0 0.0
    %457 = vmatpush1.msra.mxu0 0.0
    %458 = vmatprep.subr.mxu0 0.0
    %459 = vmatpush1.msra.mxu0 0.0
    %460 = vmatprep.subr.mxu0 0.0
    %461 = vmatpush1.msra.mxu0 0.0
    %462 = vmatprep.subr.mxu0 0.0
    %463 = vmatpush1.msra.mxu0 0.0
    %464 = vmatprep.subr.mxu0 0.0
    %465 = vmatpush1.msra.mxu0 0.0
    %466 = vmatprep.subr.mxu0 0.0
    %467 = vmatpush1.msra.mxu0 0.0
    %468 = vmatprep.subr.mxu0 0.0
    %469 = vmatpush1.msra.mxu0 0.0
    %470 = vmatprep.subr.mxu0 0.0
    %471 = vmatpush1.msra.mxu0 0.0
    %472 = vmatprep.subr.mxu0 0.0
    %473 = vmatpush1.msra.mxu0 0.0
    %474 = vmatprep.subr.mxu0 0.0
    %475 = vmatpush1.msra.mxu0 0.0
    %476 = vmatprep.subr.mxu0 0.0
    %477 = vmatpush1.msra.mxu0 0.0
    %478 = vmatprep.subr.mxu0 0.0
    %479 = vmatpush1.msra.mxu0 0.0
    %480 = vmatprep.subr.mxu0 0.0
    %481 = vmatpush1.msra.mxu0 0.0
    %482 = vmatprep.mubr.f32.mxu0 0.0
    %483 = vmatmul.mubr.f32.gmra.mrb[0].mxu0 %v414
    %v484 = vpop.f32.mrb[0].mxu0
    %v485 = vadd.f32 0.0, %v484
    %v486 = vpop.f32.mrb[0].mxu0
    %487 = vmatprep.mubr.f32.mxu0 0.0
    %488 = vmatmul.mubr.f32.gmra.mrb[0].mxu0 %v416
    %v489 = vpop.f32.mrb[0].mxu0
    %v490 = vadd.f32 0.0, %v489
    %v491 = vpop.f32.mrb[0].mxu0
    %492 = vdwg.mxu0
    %495 = vrot.lane.b32.xlu0 %v404, 96
    %v496 = vpop.permute.xlu0 %495
    %497 = vrot.lane.b32.xlu0 %v405, 96
    %v498 = vpop.permute.xlu0 %497
    %501 = vrot.lane.b32.xlu0 %v309, 96
    %v502 = vpop.permute.xlu0 %501
    %503 = vrot.lane.b32.xlu0 %v310, 96
    %v504 = vpop.permute.xlu0 %503
    %vm505 = vcmask 31744
    %v506 = vsel %vm505, %v496, 0
    %v508 = vsel %vm505, %v498, 0
    %v510 = vsel %vm505, %v502, 0
    %v512 = vsel %vm505, %v504, 0
    %514 = vmatprep.subr.mxu0 0.0
    %515 = vmatpush1.xpose.msra.mxu0 %v510
    %516 = vmatprep.subr.mxu0 0.0
    %517 = vmatpush1.xpose.msra.mxu0 %v512
    %518 = vmatprep.subr.mxu0 0.0
    %519 = vmatpush1.xpose.msra.mxu0 0.0
    %520 = vmatprep.subr.mxu0 0.0
    %521 = vmatpush1.xpose.msra.mxu0 0.0
    %522 = vmatprep.subr.mxu0 0.0
    %523 = vmatpush1.xpose.msra.mxu0 0.0
    %524 = vmatprep.subr.mxu0 0.0
    %525 = vmatpush1.xpose.msra.mxu0 0.0
    %526 = vmatprep.subr.mxu0 0.0
    %527 = vmatpush1.xpose.msra.mxu0 0.0
    %528 = vmatprep.subr.mxu0 0.0
    %529 = vmatpush1.xpose.msra.mxu0 0.0
    %530 = vmatprep.subr.mxu0 0.0
    %531 = vmatpush1.xpose.msra.mxu0 0.0
    %532 = vmatprep.subr.mxu0 0.0
    %533 = vmatpush1.xpose.msra.mxu0 0.0
    %534 = vmatprep.subr.mxu0 0.0
    %535 = vmatpush1.xpose.msra.mxu0 0.0
    %536 = vmatprep.subr.mxu0 0.0
    %537 = vmatpush1.xpose.msra.mxu0 0.0
    %538 = vmatprep.subr.mxu0 0.0
    %539 = vmatpush1.xpose.msra.mxu0 0.0
    %540 = vmatprep.subr.mxu0 0.0
    %541 = vmatpush1.xpose.msra.mxu0 0.0
    %542 = vmatprep.subr.mxu0 0.0
    %543 = vmatpush1.xpose.msra.mxu0 0.0
    %544 = vmatprep.subr.mxu0 0.0
    %545 = vmatpush1.xpose.msra.mxu0 0.0
    %546 = vmatprep.subr.mxu0 0.0
    %547 = vmatpush1.xpose.msra.mxu0 0.0
    %548 = vmatprep.subr.mxu0 0.0
    %549 = vmatpush1.xpose.msra.mxu0 0.0
    %550 = vmatprep.subr.mxu0 0.0
    %551 = vmatpush1.xpose.msra.mxu0 0.0
    %552 = vmatprep.subr.mxu0 0.0
    %553 = vmatpush1.xpose.msra.mxu0 0.0
    %554 = vmatprep.subr.mxu0 0.0
    %555 = vmatpush1.xpose.msra.mxu0 0.0
    %556 = vmatprep.subr.mxu0 0.0
    %557 = vmatpush1.xpose.msra.mxu0 0.0
    %558 = vmatprep.subr.mxu0 0.0
    %559 = vmatpush1.xpose.msra.mxu0 0.0
    %560 = vmatprep.subr.mxu0 0.0
    %561 = vmatpush1.xpose.msra.mxu0 0.0
    %562 = vmatprep.subr.mxu0 0.0
    %563 = vmatpush1.xpose.msra.mxu0 0.0
    %564 = vmatprep.subr.mxu0 0.0
    %565 = vmatpush1.xpose.msra.mxu0 0.0
    %566 = vmatprep.subr.mxu0 0.0
    %567 = vmatpush1.xpose.msra.mxu0 0.0
    %568 = vmatprep.subr.mxu0 0.0
    %569 = vmatpush1.xpose.msra.mxu0 0.0
    %570 = vmatprep.subr.mxu0 0.0
    %571 = vmatpush1.xpose.msra.mxu0 0.0
    %572 = vmatprep.subr.mxu0 0.0
    %573 = vmatpush1.xpose.msra.mxu0 0.0
    %574 = vmatprep.subr.mxu0 0.0
    %575 = vmatpush1.xpose.msra.mxu0 0.0
    %576 = vmatprep.subr.mxu0 0.0
    %577 = vmatpush1.xpose.msra.mxu0 0.0
    %578 = vmatprep.mubr.f32.mxu0 0.0
    %579 = vmatmul.mubr.f32.gmra.mrb[0].mxu0 %v506
    %v580 = vpop.f32.mrb[0].mxu0
    %v581 = vadd.f32 0.0, %v580
    %v582 = vpop.f32.mrb[0].mxu0
    %583 = vmatprep.mubr.f32.mxu0 0.0
    %584 = vmatmul.mubr.f32.gmra.mrb[0].mxu0 %v508
    %v585 = vpop.f32.mrb[0].mxu0
    %v586 = vadd.f32 0.0, %v585
    %v587 = vpop.f32.mrb[0].mxu0
    %588 = vdwg.mxu0
    %vm589 = vcmask 64512
    %v591 = vsel %vm589, %v386, 0
    %v594 = vsel %vm589, %v391, 0
    %v597 = vsel %vm589, %v485, 0
    %v600 = vsel %vm589, %v490, 0
    %602 = vmatprep.subr.mxu0 0.0
    %603 = vmatpush1.xpose.msra.mxu0 %v597
    %604 = vmatprep.subr.mxu0 0.0
    %605 = vmatpush1.xpose.msra.mxu0 %v600
    %606 = vmatprep.subr.mxu0 0.0
    %607 = vmatpush1.xpose.msra.mxu0 0.0
    %608 = vmatprep.subr.mxu0 0.0
    %609 = vmatpush1.xpose.msra.mxu0 0.0
    %610 = vmatprep.subr.mxu0 0.0
    %611 = vmatpush1.xpose.msra.mxu0 0.0
    %612 = vmatprep.subr.mxu0 0.0
    %613 = vmatpush1.xpose.msra.mxu0 0.0
    %614 = vmatprep.subr.mxu0 0.0
    %615 = vmatpush1.xpose.msra.mxu0 0.0
    %616 = vmatprep.subr.mxu0 0.0
    %617 = vmatpush1.xpose.msra.mxu0 0.0
    %618 = vmatprep.subr.mxu0 0.0
    %619 = vmatpush1.xpose.msra.mxu0 0.0
    %620 = vmatprep.subr.mxu0 0.0
    %621 = vmatpush1.xpose.msra.mxu0 0.0
    %622 = vmatprep.subr.mxu0 0.0
    %623 = vmatpush1.xpose.msra.mxu0 0.0
    %624 = vmatprep.subr.mxu0 0.0
    %625 = vmatpush1.xpose.msra.mxu0 0.0
    %626 = vmatprep.subr.mxu0 0.0
    %627 = vmatpush1.xpose.msra.mxu0 0.0
    %628 = vmatprep.subr.mxu0 0.0
    %629 = vmatpush1.xpose.msra.mxu0 0.0
    %630 = vmatprep.subr.mxu0 0.0
    %631 = vmatpush1.xpose.msra.mxu0 0.0
    %632 = vmatprep.subr.mxu0 0.0
    %633 = vmatpush1.xpose.msra.mxu0 0.0
    %634 = vmatprep.subr.mxu0 0.0
    %635 = vmatpush1.xpose.msra.mxu0 0.0
    %636 = vmatprep.subr.mxu0 0.0
    %637 = vmatpush1.xpose.msra.mxu0 0.0
    %638 = vmatprep.subr.mxu0 0.0
    %639 = vmatpush1.xpose.msra.mxu0 0.0
    %640 = vmatprep.subr.mxu0 0.0
    %641 = vmatpush1.xpose.msra.mxu0 0.0
    %642 = vmatprep.subr.mxu0 0.0
    %643 = vmatpush1.xpose.msra.mxu0 0.0
    %644 = vmatprep.subr.mxu0 0.0
    %645 = vmatpush1.xpose.msra.mxu0 0.0
    %646 = vmatprep.subr.mxu0 0.0
    %647 = vmatpush1.xpose.msra.mxu0 0.0
    %648 = vmatprep.subr.mxu0 0.0
    %649 = vmatpush1.xpose.msra.mxu0 0.0
    %650 = vmatprep.subr.mxu0 0.0
    %651 = vmatpush1.xpose.msra.mxu0 0.0
    %652 = vmatprep.subr.mxu0 0.0
    %653 = vmatpush1.xpose.msra.mxu0 0.0
    %654 = vmatprep.subr.mxu0 0.0
    %655 = vmatpush1.xpose.msra.mxu0 0.0
    %656 = vmatprep.subr.mxu0 0.0
    %657 = vmatpush1.xpose.msra.mxu0 0.0
    %658 = vmatprep.subr.mxu0 0.0
    %659 = vmatpush1.xpose.msra.mxu0 0.0
    %660 = vmatprep.subr.mxu0 0.0
    %661 = vmatpush1.xpose.msra.mxu0 0.0
    %662 = vmatprep.subr.mxu0 0.0
    %663 = vmatpush1.xpose.msra.mxu0 0.0
    %664 = vmatprep.subr.mxu0 0.0
    %665 = vmatpush1.xpose.msra.mxu0 0.0
    %666 = vmatprep.mubr.f32.mxu0 0.0
    %667 = vmatmul.mubr.f32.gmra.mrb[0].mxu0 %v591
    %v668 = vpop.f32.mrb[0].mxu0
    %v669 = vadd.f32 %v581, %v668
    %v670 = vpop.f32.mrb[0].mxu0
    %671 = vmatprep.mubr.f32.mxu0 0.0
    %672 = vmatmul.mubr.f32.gmra.mrb[0].mxu0 %v594
    %v673 = vpop.f32.mrb[0].mxu0
    %v674 = vadd.f32 %v586, %v673
    %v675 = vpop.f32.mrb[0].mxu0
    %676 = vdwg.mxu0
    %v677 = vadd.f32 %v669, %v123
    %v678 = vadd.f32 %v674, %v124
    %v679 = vsel %vm238, %v677, -inf
    %680 = vmax.xlane.f32.xlu0 %v679
    %v681 = vpop.xlane.xlu0 %680
    %v682 = vsel %vm238, %v678, -inf
    %683 = vmax.xlane.f32.xlu0 %v682
    %v684 = vpop.xlane.xlu0 %683
    %v685 = vsub.f32 %v677, %v681
    %v686 = vsub.f32 %v678, %v684
    %v687 = vmul.f32 %v685, 1.442695
    %v688 = vpow.pop %v687
    %v689 = vmul.f32 %v686, 1.442695
    %v690 = vpow.pop %v689
    %v691 = vsel %vm238, %v688, 0.0
    %692 = vadd.xlane.f32.xlu0 %v691
    %v693 = vpop.xlane.xlu0 %692
    %v694 = vsel %vm238, %v690, 0.0
    %695 = vadd.xlane.f32.xlu0 %v694
    %v696 = vpop.xlane.xlu0 %695
    %v697 = vrcp.pop %v693
    %v698 = vrcp.pop %v696
    %v699 = vmul.f32 %v688, %v697
    %v700 = vmul.f32 %v690, %v698
    %v701 = vld [vmem:[%s7] sm:$0xff]
    %v702 = vld [vmem:[%s7 + $0x8] sm:$0xff]
    %703 = vmatprep.subr.mxu0 0.0
    %704 = vmatpush1.msra.mxu0 %v701
    %705 = vmatprep.subr.mxu0 0.0
    %706 = vmatpush1.msra.mxu0 %v702
    %707 = vmatprep.subr.mxu0 0.0
    %708 = vmatpush1.msra.mxu0 0.0
    %709 = vmatprep.subr.mxu0 0.0
    %710 = vmatpush1.msra.mxu0 0.0
    %711 = vmatprep.subr.mxu0 0.0
    %712 = vmatpush1.msra.mxu0 0.0
    %713 = vmatprep.subr.mxu0 0.0
    %714 = vmatpush1.msra.mxu0 0.0
    %715 = vmatprep.subr.mxu0 0.0
    %716 = vmatpush1.msra.mxu0 0.0
    %717 = vmatprep.subr.mxu0 0.0
    %718 = vmatpush1.msra.mxu0 0.0
    %719 = vmatprep.subr.mxu0 0.0
    %720 = vmatpush1.msra.mxu0 0.0
    %721 = vmatprep.subr.mxu0 0.0
    %722 = vmatpush1.msra.mxu0 0.0
    %723 = vmatprep.subr.mxu0 0.0
    %724 = vmatpush1.msra.mxu0 0.0
    %725 = vmatprep.subr.mxu0 0.0
    %726 = vmatpush1.msra.mxu0 0.0
    %727 = vmatprep.subr.mxu0 0.0
    %728 = vmatpush1.msra.mxu0 0.0
    %729 = vmatprep.subr.mxu0 0.0
    %730 = vmatpush1.msra.mxu0 0.0
    %731 = vmatprep.subr.mxu0 0.0
    %732 = vmatpush1.msra.mxu0 0.0
    %733 = vmatprep.subr.mxu0 0.0
    %734 = vmatpush1.msra.mxu0 0.0
    %735 = vmatprep.subr.mxu0 0.0
    %736 = vmatpush1.msra.mxu0 0.0
    %737 = vmatprep.subr.mxu0 0.0
    %738 = vmatpush1.msra.mxu0 0.0
    %739 = vmatprep.subr.mxu0 0.0
    %740 = vmatpush1.msra.mxu0 0.0
    %741 = vmatprep.subr.mxu0 0.0
    %742 = vmatpush1.msra.mxu0 0.0
    %743 = vmatprep.subr.mxu0 0.0
    %744 = vmatpush1.msra.mxu0 0.0
    %745 = vmatprep.subr.mxu0 0.0
    %746 = vmatpush1.msra.mxu0 0.0
    %747 = vmatprep.subr.mxu0 0.0
    %748 = vmatpush1.msra.mxu0 0.0
    %749 = vmatprep.subr.mxu0 0.0
    %750 = vmatpush1.msra.mxu0 0.0
    %751 = vmatprep.subr.mxu0 0.0
    %752 = vmatpush1.msra.mxu0 0.0
    %753 = vmatprep.subr.mxu0 0.0
    %754 = vmatpush1.msra.mxu0 0.0
    %755 = vmatprep.subr.mxu0 0.0
    %756 = vmatpush1.msra.mxu0 0.0
    %757 = vmatprep.subr.mxu0 0.0
    %758 = vmatpush1.msra.mxu0 0.0
    %759 = vmatprep.subr.mxu0 0.0
    %760 = vmatpush1.msra.mxu0 0.0
    %761 = vmatprep.subr.mxu0 0.0
    %762 = vmatpush1.msra.mxu0 0.0
    %763 = vmatprep.subr.mxu0 0.0
    %764 = vmatpush1.msra.mxu0 0.0
    %765 = vmatprep.subr.mxu0 0.0
    %766 = vmatpush1.msra.mxu0 0.0
    %767 = vmatprep.mubr.f32.mxu0 0.0
    %768 = vmatmul.mubr.f32.gmra.mrb[0].mxu0 %v414
    %v769 = vpop.f32.mrb[0].mxu0
    %v770 = vadd.f32 0.0, %v769
    %v771 = vpop.f32.mrb[0].mxu0
    %772 = vmatprep.mubr.f32.mxu0 0.0
    %773 = vmatmul.mubr.f32.gmra.mrb[0].mxu0 %v416
    %v774 = vpop.f32.mrb[0].mxu0
    %v775 = vadd.f32 0.0, %v774
    %v776 = vpop.f32.mrb[0].mxu0
    %777 = vdwg.mxu0
    %778 = vrot.lane.b32.xlu0 %v404, 92
    %v779 = vpop.permute.xlu0 %778
    %780 = vrot.lane.b32.xlu0 %v405, 92
    %v781 = vpop.permute.xlu0 %780
    %v782 = vsel %vm505, %v779, 0
    %v784 = vsel %vm505, %v781, 0
    %786 = vmatprep.subr.mxu0 0.0
    %787 = vmatpush1.xpose.msra.mxu0 %v510
    %788 = vmatprep.subr.mxu0 0.0
    %789 = vmatpush1.xpose.msra.mxu0 %v512
    %790 = vmatprep.subr.mxu0 0.0
    %791 = vmatpush1.xpose.msra.mxu0 0.0
    %792 = vmatprep.subr.mxu0 0.0
    %793 = vmatpush1.xpose.msra.mxu0 0.0
    %794 = vmatprep.subr.mxu0 0.0
    %795 = vmatpush1.xpose.msra.mxu0 0.0
    %796 = vmatprep.subr.mxu0 0.0
    %797 = vmatpush1.xpose.msra.mxu0 0.0
    %798 = vmatprep.subr.mxu0 0.0
    %799 = vmatpush1.xpose.msra.mxu0 0.0
    %800 = vmatprep.subr.mxu0 0.0
    %801 = vmatpush1.xpose.msra.mxu0 0.0
    %802 = vmatprep.subr.mxu0 0.0
    %803 = vmatpush1.xpose.msra.mxu0 0.0
    %804 = vmatprep.subr.mxu0 0.0
    %805 = vmatpush1.xpose.msra.mxu0 0.0
    %806 = vmatprep.subr.mxu0 0.0
    %807 = vmatpush1.xpose.msra.mxu0 0.0
    %808 = vmatprep.subr.mxu0 0.0
    %809 = vmatpush1.xpose.msra.mxu0 0.0
    %810 = vmatprep.subr.mxu0 0.0
    %811 = vmatpush1.xpose.msra.mxu0 0.0
    %812 = vmatprep.subr.mxu0 0.0
    %813 = vmatpush1.xpose.msra.mxu0 0.0
    %814 = vmatprep.subr.mxu0 0.0
    %815 = vmatpush1.xpose.msra.mxu0 0.0
    %816 = vmatprep.subr.mxu0 0.0
    %817 = vmatpush1.xpose.msra.mxu0 0.0
    %818 = vmatprep.subr.mxu0 0.0
    %819 = vmatpush1.xpose.msra.mxu0 0.0
    %820 = vmatprep.subr.mxu0 0.0
    %821 = vmatpush1.xpose.msra.mxu0 0.0
    %822 = vmatprep.subr.mxu0 0.0
    %823 = vmatpush1.xpose.msra.mxu0 0.0
    %824 = vmatprep.subr.mxu0 0.0
    %825 = vmatpush1.xpose.msra.mxu0 0.0
    %826 = vmatprep.subr.mxu0 0.0
    %827 = vmatpush1.xpose.msra.mxu0 0.0
    %828 = vmatprep.subr.mxu0 0.0
    %829 = vmatpush1.xpose.msra.mxu0 0.0
    %830 = vmatprep.subr.mxu0 0.0
    %831 = vmatpush1.xpose.msra.mxu0 0.0
    %832 = vmatprep.subr.mxu0 0.0
    %833 = vmatpush1.xpose.msra.mxu0 0.0
    %834 = vmatprep.subr.mxu0 0.0
    %835 = vmatpush1.xpose.msra.mxu0 0.0
    %836 = vmatprep.subr.mxu0 0.0
    %837 = vmatpush1.xpose.msra.mxu0 0.0
    %838 = vmatprep.subr.mxu0 0.0
    %839 = vmatpush1.xpose.msra.mxu0 0.0
    %840 = vmatprep.subr.mxu0 0.0
    %841 = vmatpush1.xpose.msra.mxu0 0.0
    %842 = vmatprep.subr.mxu0 0.0
    %843 = vmatpush1.xpose.msra.mxu0 0.0
    %844 = vmatprep.subr.mxu0 0.0
    %845 = vmatpush1.xpose.msra.mxu0 0.0
    %846 = vmatprep.subr.mxu0 0.0
    %847 = vmatpush1.xpose.msra.mxu0 0.0
    %848 = vmatprep.subr.mxu0 0.0
    %849 = vmatpush1.xpose.msra.mxu0 0.0
    %850 = vmatprep.mubr.f32.mxu0 0.0
    %851 = vmatmul.mubr.f32.gmra.mrb[0].mxu0 %v782
    %v852 = vpop.f32.mrb[0].mxu0
    %v853 = vadd.f32 0.0, %v852
    %v854 = vpop.f32.mrb[0].mxu0
    %855 = vmatprep.mubr.f32.mxu0 0.0
    %856 = vmatmul.mubr.f32.gmra.mrb[0].mxu0 %v784
    %v857 = vpop.f32.mrb[0].mxu0
    %v858 = vadd.f32 0.0, %v857
    %v859 = vpop.f32.mrb[0].mxu0
    %860 = vdwg.mxu0
    %861 = vrot.lane.b32.xlu0 %v386, 120
    %v862 = vpop.permute.xlu0 %861
    %863 = vrot.lane.b32.xlu0 %v391, 120
    %v864 = vpop.permute.xlu0 %863
    %865 = vrot.lane.b32.xlu0 %v485, 120
    %v866 = vpop.permute.xlu0 %865
    %867 = vrot.lane.b32.xlu0 %v490, 120
    %v868 = vpop.permute.xlu0 %867
    %v869 = vsel %vm589, %v862, 0
    %v871 = vsel %vm589, %v864, 0
    %v873 = vsel %vm589, %v866, 0
    %v875 = vsel %vm589, %v868, 0
    %877 = vmatprep.subr.mxu0 0.0
    %878 = vmatpush1.xpose.msra.mxu0 %v873
    %879 = vmatprep.subr.mxu0 0.0
    %880 = vmatpush1.xpose.msra.mxu0 %v875
    %881 = vmatprep.subr.mxu0 0.0
    %882 = vmatpush1.xpose.msra.mxu0 0.0
    %883 = vmatprep.subr.mxu0 0.0
    %884 = vmatpush1.xpose.msra.mxu0 0.0
    %885 = vmatprep.subr.mxu0 0.0
    %886 = vmatpush1.xpose.msra.mxu0 0.0
    %887 = vmatprep.subr.mxu0 0.0
    %888 = vmatpush1.xpose.msra.mxu0 0.0
    %889 = vmatprep.subr.mxu0 0.0
    %890 = vmatpush1.xpose.msra.mxu0 0.0
    %891 = vmatprep.subr.mxu0 0.0
    %892 = vmatpush1.xpose.msra.mxu0 0.0
    %893 = vmatprep.subr.mxu0 0.0
    %894 = vmatpush1.xpose.msra.mxu0 0.0
    %895 = vmatprep.subr.mxu0 0.0
    %896 = vmatpush1.xpose.msra.mxu0 0.0
    %897 = vmatprep.subr.mxu0 0.0
    %898 = vmatpush1.xpose.msra.mxu0 0.0
    %899 = vmatprep.subr.mxu0 0.0
    %900 = vmatpush1.xpose.msra.mxu0 0.0
    %901 = vmatprep.subr.mxu0 0.0
    %902 = vmatpush1.xpose.msra.mxu0 0.0
    %903 = vmatprep.subr.mxu0 0.0
    %904 = vmatpush1.xpose.msra.mxu0 0.0
    %905 = vmatprep.subr.mxu0 0.0
    %906 = vmatpush1.xpose.msra.mxu0 0.0
    %907 = vmatprep.subr.mxu0 0.0
    %908 = vmatpush1.xpose.msra.mxu0 0.0
    %909 = vmatprep.subr.mxu0 0.0
    %910 = vmatpush1.xpose.msra.mxu0 0.0
    %911 = vmatprep.subr.mxu0 0.0
    %912 = vmatpush1.xpose.msra.mxu0 0.0
    %913 = vmatprep.subr.mxu0 0.0
    %914 = vmatpush1.xpose.msra.mxu0 0.0
    %915 = vmatprep.subr.mxu0 0.0
    %916 = vmatpush1.xpose.msra.mxu0 0.0
    %917 = vmatprep.subr.mxu0 0.0
    %918 = vmatpush1.xpose.msra.mxu0 0.0
    %919 = vmatprep.subr.mxu0 0.0
    %920 = vmatpush1.xpose.msra.mxu0 0.0
    %921 = vmatprep.subr.mxu0 0.0
    %922 = vmatpush1.xpose.msra.mxu0 0.0
    %923 = vmatprep.subr.mxu0 0.0
    %924 = vmatpush1.xpose.msra.mxu0 0.0
    %925 = vmatprep.subr.mxu0 0.0
    %926 = vmatpush1.xpose.msra.mxu0 0.0
    %927 = vmatprep.subr.mxu0 0.0
    %928 = vmatpush1.xpose.msra.mxu0 0.0
    %929 = vmatprep.subr.mxu0 0.0
    %930 = vmatpush1.xpose.msra.mxu0 0.0
    %931 = vmatprep.subr.mxu0 0.0
    %932 = vmatpush1.xpose.msra.mxu0 0.0
    %933 = vmatprep.subr.mxu0 0.0
    %934 = vmatpush1.xpose.msra.mxu0 0.0
    %935 = vmatprep.subr.mxu0 0.0
    %936 = vmatpush1.xpose.msra.mxu0 0.0
    %937 = vmatprep.subr.mxu0 0.0
    %938 = vmatpush1.xpose.msra.mxu0 0.0
    %939 = vmatprep.subr.mxu0 0.0
    %940 = vmatpush1.xpose.msra.mxu0 0.0
    %941 = vmatprep.mubr.f32.mxu0 0.0
    %942 = vmatmul.mubr.f32.gmra.mrb[0].mxu0 %v869
    %v943 = vpop.f32.mrb[0].mxu0
    %v944 = vadd.f32 %v853, %v943
    %v945 = vpop.f32.mrb[0].mxu0
    %946 = vmatprep.mubr.f32.mxu0 0.0
    %947 = vmatmul.mubr.f32.gmra.mrb[0].mxu0 %v871
    %v948 = vpop.f32.mrb[0].mxu0
    %v949 = vadd.f32 %v858, %v948
    %v950 = vpop.f32.mrb[0].mxu0
    %951 = vdwg.mxu0
    %v952 = vadd.f32 %v944, %v123
    %v953 = vadd.f32 %v949, %v124
    %v954 = vsel %vm238, %v952, -inf
    %955 = vmax.xlane.f32.xlu0 %v954
    %v956 = vpop.xlane.xlu0 %955
    %v957 = vsel %vm238, %v953, -inf
    %958 = vmax.xlane.f32.xlu0 %v957
    %v959 = vpop.xlane.xlu0 %958
    %v960 = vsub.f32 %v952, %v956
    %v961 = vsub.f32 %v953, %v959
    %v962 = vmul.f32 %v960, 1.442695
    %v963 = vpow.pop %v962
    %v964 = vmul.f32 %v961, 1.442695
    %v965 = vpow.pop %v964
    %v966 = vsel %vm238, %v963, 0.0
    %967 = vadd.xlane.f32.xlu0 %v966
    %v968 = vpop.xlane.xlu0 %967
    %v969 = vsel %vm238, %v965, 0.0
    %970 = vadd.xlane.f32.xlu0 %v969
    %v971 = vpop.xlane.xlu0 %970
    %v972 = vrcp.pop %v968
    %v973 = vrcp.pop %v971
    %v974 = vmul.f32 %v963, %v972
    %v975 = vmul.f32 %v965, %v973
    %s976 = scalar_lea.vmem %s7, 16
    %v977 = vld [vmem:[%s976] sm:$0xff]
    %v978 = vld [vmem:[%s976 + $0x8] sm:$0xff]
    %979 = vmatprep.subr.mxu0 0.0
    %980 = vmatpush1.msra.mxu0 %v977
    %981 = vmatprep.subr.mxu0 0.0
    %982 = vmatpush1.msra.mxu0 %v978
    %983 = vmatprep.subr.mxu0 0.0
    %984 = vmatpush1.msra.mxu0 0.0
    %985 = vmatprep.subr.mxu0 0.0
    %986 = vmatpush1.msra.mxu0 0.0
    %987 = vmatprep.subr.mxu0 0.0
    %988 = vmatpush1.msra.mxu0 0.0
    %989 = vmatprep.subr.mxu0 0.0
    %990 = vmatpush1.msra.mxu0 0.0
    %991 = vmatprep.subr.mxu0 0.0
    %992 = vmatpush1.msra.mxu0 0.0
    %993 = vmatprep.subr.mxu0 0.0
    %994 = vmatpush1.msra.mxu0 0.0
    %995 = vmatprep.subr.mxu0 0.0
    %996 = vmatpush1.msra.mxu0 0.0
    %997 = vmatprep.subr.mxu0 0.0
    %998 = vmatpush1.msra.mxu0 0.0
    %999 = vmatprep.subr.mxu0 0.0
    %1000 = vmatpush1.msra.mxu0 0.0
    %1001 = vmatprep.subr.mxu0 0.0
    %1002 = vmatpush1.msra.mxu0 0.0
    %1003 = vmatprep.subr.mxu0 0.0
    %1004 = vmatpush1.msra.mxu0 0.0
    %1005 = vmatprep.subr.mxu0 0.0
    %1006 = vmatpush1.msra.mxu0 0.0
    %1007 = vmatprep.subr.mxu0 0.0
    %1008 = vmatpush1.msra.mxu0 0.0
    %1009 = vmatprep.subr.mxu0 0.0
    %1010 = vmatpush1.msra.mxu0 0.0
    %1011 = vmatprep.subr.mxu0 0.0
    %1012 = vmatpush1.msra.mxu0 0.0
    %1013 = vmatprep.subr.mxu0 0.0
    %1014 = vmatpush1.msra.mxu0 0.0
    %1015 = vmatprep.subr.mxu0 0.0
    %1016 = vmatpush1.msra.mxu0 0.0
    %1017 = vmatprep.subr.mxu0 0.0
    %1018 = vmatpush1.msra.mxu0 0.0
    %1019 = vmatprep.subr.mxu0 0.0
    %1020 = vmatpush1.msra.mxu0 0.0
    %1021 = vmatprep.subr.mxu0 0.0
    %1022 = vmatpush1.msra.mxu0 0.0
    %1023 = vmatprep.subr.mxu0 0.0
    %1024 = vmatpush1.msra.mxu0 0.0
    %1025 = vmatprep.subr.mxu0 0.0
    %1026 = vmatpush1.msra.mxu0 0.0
    %1027 = vmatprep.subr.mxu0 0.0
    %1028 = vmatpush1.msra.mxu0 0.0
    %1029 = vmatprep.subr.mxu0 0.0
    %1030 = vmatpush1.msra.mxu0 0.0
    %1031 = vmatprep.subr.mxu0 0.0
    %1032 = vmatpush1.msra.mxu0 0.0
    %1033 = vmatprep.subr.mxu0 0.0
    %1034 = vmatpush1.msra.mxu0 0.0
    %1035 = vmatprep.subr.mxu0 0.0
    %1036 = vmatpush1.msra.mxu0 0.0
    %1037 = vmatprep.subr.mxu0 0.0
    %1038 = vmatpush1.msra.mxu0 0.0
    %1039 = vmatprep.subr.mxu0 0.0
    %1040 = vmatpush1.msra.mxu0 0.0
    %1041 = vmatprep.subr.mxu0 0.0
    %1042 = vmatpush1.msra.mxu0 0.0
    %1043 = vmatprep.mubr.f32.mxu0 0.0
    %1044 = vmatmul.mubr.f32.gmra.mrb[0].mxu0 %v414
    %v1045 = vpop.f32.mrb[0].mxu0
    %v1046 = vadd.f32 0.0, %v1045
    %v1047 = vpop.f32.mrb[0].mxu0
    %1048 = vmatprep.mubr.f32.mxu0 0.0
    %1049 = vmatmul.mubr.f32.gmra.mrb[0].mxu0 %v416
    %v1050 = vpop.f32.mrb[0].mxu0
    %v1051 = vadd.f32 0.0, %v1050
    %v1052 = vpop.f32.mrb[0].mxu0
    %1053 = vdwg.mxu0
    %v1055 = vsel %vm238, %v974, 0
    %v1058 = vsel %vm238, %v975, 0
    %1060 = vmatprep.subr.mxu0 0.0
    %1061 = vmatpush1.msra.mxu0 %v1046
    %1062 = vmatprep.subr.mxu0 0.0
    %1063 = vmatpush1.msra.mxu0 %v1051
    %1064 = vmatprep.subr.mxu0 0.0
    %1065 = vmatpush1.msra.mxu0 0.0
    %1066 = vmatprep.subr.mxu0 0.0
    %1067 = vmatpush1.msra.mxu0 0.0
    %1068 = vmatprep.subr.mxu0 0.0
    %1069 = vmatpush1.msra.mxu0 0.0
    %1070 = vmatprep.subr.mxu0 0.0
    %1071 = vmatpush1.msra.mxu0 0.0
    %1072 = vmatprep.subr.mxu0 0.0
    %1073 = vmatpush1.msra.mxu0 0.0
    %1074 = vmatprep.subr.mxu0 0.0
    %1075 = vmatpush1.msra.mxu0 0.0
    %1076 = vmatprep.subr.mxu0 0.0
    %1077 = vmatpush1.msra.mxu0 0.0
    %1078 = vmatprep.subr.mxu0 0.0
    %1079 = vmatpush1.msra.mxu0 0.0
    %1080 = vmatprep.subr.mxu0 0.0
    %1081 = vmatpush1.msra.mxu0 0.0
    %1082 = vmatprep.subr.mxu0 0.0
    %1083 = vmatpush1.msra.mxu0 0.0
    %1084 = vmatprep.subr.mxu0 0.0
    %1085 = vmatpush1.msra.mxu0 0.0
    %1086 = vmatprep.subr.mxu0 0.0
    %1087 = vmatpush1.msra.mxu0 0.0
    %1088 = vmatprep.subr.mxu0 0.0
    %1089 = vmatpush1.msra.mxu0 0.0
    %1090 = vmatprep.subr.mxu0 0.0
    %1091 = vmatpush1.msra.mxu0 0.0
    %1092 = vmatprep.subr.mxu0 0.0
    %1093 = vmatpush1.msra.mxu0 0.0
    %1094 = vmatprep.subr.mxu0 0.0
    %1095 = vmatpush1.msra.mxu0 0.0
    %1096 = vmatprep.subr.mxu0 0.0
    %1097 = vmatpush1.msra.mxu0 0.0
    %1098 = vmatprep.subr.mxu0 0.0
    %1099 = vmatpush1.msra.mxu0 0.0
    %1100 = vmatprep.subr.mxu0 0.0
    %1101 = vmatpush1.msra.mxu0 0.0
    %1102 = vmatprep.subr.mxu0 0.0
    %1103 = vmatpush1.msra.mxu0 0.0
    %1104 = vmatprep.subr.mxu0 0.0
    %1105 = vmatpush1.msra.mxu0 0.0
    %1106 = vmatprep.subr.mxu0 0.0
    %1107 = vmatpush1.msra.mxu0 0.0
    %1108 = vmatprep.subr.mxu0 0.0
    %1109 = vmatpush1.msra.mxu0 0.0
    %1110 = vmatprep.subr.mxu0 0.0
    %1111 = vmatpush1.msra.mxu0 0.0
    %1112 = vmatprep.subr.mxu0 0.0
    %1113 = vmatpush1.msra.mxu0 0.0
    %1114 = vmatprep.subr.mxu0 0.0
    %1115 = vmatpush1.msra.mxu0 0.0
    %1116 = vmatprep.subr.mxu0 0.0
    %1117 = vmatpush1.msra.mxu0 0.0
    %1118 = vmatprep.subr.mxu0 0.0
    %1119 = vmatpush1.msra.mxu0 0.0
    %1120 = vmatprep.subr.mxu0 0.0
    %1121 = vmatpush1.msra.mxu0 0.0
    %1122 = vmatprep.subr.mxu0 0.0
    %1123 = vmatpush1.msra.mxu0 0.0
    %1124 = vmatprep.mubr.f32.mxu0 0.0
    %1125 = vmatmul.mubr.f32.gmra.mrb[0].mxu0 %v1055
    %v1126 = vpop.f32.mrb[0].mxu0
    %v1127 = vadd.f32 0.0, %v1126
    %v1128 = vpop.f32.mrb[0].mxu0
    %1129 = vmatprep.mubr.f32.mxu0 0.0
    %1130 = vmatmul.mubr.f32.gmra.mrb[0].mxu0 %v1058
    %v1131 = vpop.f32.mrb[0].mxu0
    %v1132 = vadd.f32 0.0, %v1131
    %v1133 = vpop.f32.mrb[0].mxu0
    %1134 = vdwg.mxu0
    %v1136 = vsel %vm238, %v699, 0
    %v1139 = vsel %vm238, %v700, 0
    %1141 = vmatprep.subr.mxu0 0.0
    %1142 = vmatpush1.msra.mxu0 %v770
    %1143 = vmatprep.subr.mxu0 0.0
    %1144 = vmatpush1.msra.mxu0 %v775
    %1145 = vmatprep.subr.mxu0 0.0
    %1146 = vmatpush1.msra.mxu0 0.0
    %1147 = vmatprep.subr.mxu0 0.0
    %1148 = vmatpush1.msra.mxu0 0.0
    %1149 = vmatprep.subr.mxu0 0.0
    %1150 = vmatpush1.msra.mxu0 0.0
    %1151 = vmatprep.subr.mxu0 0.0
    %1152 = vmatpush1.msra.mxu0 0.0
    %1153 = vmatprep.subr.mxu0 0.0
    %1154 = vmatpush1.msra.mxu0 0.0
    %1155 = vmatprep.subr.mxu0 0.0
    %1156 = vmatpush1.msra.mxu0 0.0
    %1157 = vmatprep.subr.mxu0 0.0
    %1158 = vmatpush1.msra.mxu0 0.0
    %1159 = vmatprep.subr.mxu0 0.0
    %1160 = vmatpush1.msra.mxu0 0.0
    %1161 = vmatprep.subr.mxu0 0.0
    %1162 = vmatpush1.msra.mxu0 0.0
    %1163 = vmatprep.subr.mxu0 0.0
    %1164 = vmatpush1.msra.mxu0 0.0
    %1165 = vmatprep.subr.mxu0 0.0
    %1166 = vmatpush1.msra.mxu0 0.0
    %1167 = vmatprep.subr.mxu0 0.0
    %1168 = vmatpush1.msra.mxu0 0.0
    %1169 = vmatprep.subr.mxu0 0.0
    %1170 = vmatpush1.msra.mxu0 0.0
    %1171 = vmatprep.subr.mxu0 0.0
    %1172 = vmatpush1.msra.mxu0 0.0
    %1173 = vmatprep.subr.mxu0 0.0
    %1174 = vmatpush1.msra.mxu0 0.0
    %1175 = vmatprep.subr.mxu0 0.0
    %1176 = vmatpush1.msra.mxu0 0.0
    %1177 = vmatprep.subr.mxu0 0.0
    %1178 = vmatpush1.msra.mxu0 0.0
    %1179 = vmatprep.subr.mxu0 0.0
    %1180 = vmatpush1.msra.mxu0 0.0
    %1181 = vmatprep.subr.mxu0 0.0
    %1182 = vmatpush1.msra.mxu0 0.0
    %1183 = vmatprep.subr.mxu0 0.0
    %1184 = vmatpush1.msra.mxu0 0.0
    %1185 = vmatprep.subr.mxu0 0.0
    %1186 = vmatpush1.msra.mxu0 0.0
    %1187 = vmatprep.subr.mxu0 0.0
    %1188 = vmatpush1.msra.mxu0 0.0
    %1189 = vmatprep.subr.mxu0 0.0
    %1190 = vmatpush1.msra.mxu0 0.0
    %1191 = vmatprep.subr.mxu0 0.0
    %1192 = vmatpush1.msra.mxu0 0.0
    %1193 = vmatprep.subr.mxu0 0.0
    %1194 = vmatpush1.msra.mxu0 0.0
    %1195 = vmatprep.subr.mxu0 0.0
    %1196 = vmatpush1.msra.mxu0 0.0
    %1197 = vmatprep.subr.mxu0 0.0
    %1198 = vmatpush1.msra.mxu0 0.0
    %1199 = vmatprep.subr.mxu0 0.0
    %1200 = vmatpush1.msra.mxu0 0.0
    %1201 = vmatprep.subr.mxu0 0.0
    %1202 = vmatpush1.msra.mxu0 0.0
    %1203 = vmatprep.subr.mxu0 0.0
    %1204 = vmatpush1.msra.mxu0 0.0
    %1205 = vmatprep.mubr.f32.mxu0 0.0
    %1206 = vmatmul.mubr.f32.gmra.mrb[0].mxu0 %v1136
    %v1207 = vpop.f32.mrb[0].mxu0
    %v1208 = vadd.f32 %v1127, %v1207
    %v1209 = vpop.f32.mrb[0].mxu0
    %1210 = vmatprep.mubr.f32.mxu0 0.0
    %1211 = vmatmul.mubr.f32.gmra.mrb[0].mxu0 %v1139
    %v1212 = vpop.f32.mrb[0].mxu0
    %v1213 = vadd.f32 %v1132, %v1212
    %v1214 = vpop.f32.mrb[0].mxu0
    %1215 = vdwg.mxu0
    %1216 = vrot.lane.b32.xlu0 %v404, 88
    %v1217 = vpop.permute.xlu0 %1216
    %1218 = vrot.lane.b32.xlu0 %v405, 88
    %v1219 = vpop.permute.xlu0 %1218
    %v1220 = vsel %vm505, %v1217, 0
    %v1222 = vsel %vm505, %v1219, 0
    %1224 = vmatprep.subr.mxu0 0.0
    %1225 = vmatpush1.xpose.msra.mxu0 %v510
    %1226 = vmatprep.subr.mxu0 0.0
    %1227 = vmatpush1.xpose.msra.mxu0 %v512
    %1228 = vmatprep.subr.mxu0 0.0
    %1229 = vmatpush1.xpose.msra.mxu0 0.0
    %1230 = vmatprep.subr.mxu0 0.0
    %1231 = vmatpush1.xpose.msra.mxu0 0.0
    %1232 = vmatprep.subr.mxu0 0.0
    %1233 = vmatpush1.xpose.msra.mxu0 0.0
    %1234 = vmatprep.subr.mxu0 0.0
    %1235 = vmatpush1.xpose.msra.mxu0 0.0
    %1236 = vmatprep.subr.mxu0 0.0
    %1237 = vmatpush1.xpose.msra.mxu0 0.0
    %1238 = vmatprep.subr.mxu0 0.0
    %1239 = vmatpush1.xpose.msra.mxu0 0.0
    %1240 = vmatprep.subr.mxu0 0.0
    %1241 = vmatpush1.xpose.msra.mxu0 0.0
    %1242 = vmatprep.subr.mxu0 0.0
    %1243 = vmatpush1.xpose.msra.mxu0 0.0
    %1244 = vmatprep.subr.mxu0 0.0
    %1245 = vmatpush1.xpose.msra.mxu0 0.0
    %1246 = vmatprep.subr.mxu0 0.0
    %1247 = vmatpush1.xpose.msra.mxu0 0.0
    %1248 = vmatprep.subr.mxu0 0.0
    %1249 = vmatpush1.xpose.msra.mxu0 0.0
    %1250 = vmatprep.subr.mxu0 0.0
    %1251 = vmatpush1.xpose.msra.mxu0 0.0
    %1252 = vmatprep.subr.mxu0 0.0
    %1253 = vmatpush1.xpose.msra.mxu0 0.0
    %1254 = vmatprep.subr.mxu0 0.0
    %1255 = vmatpush1.xpose.msra.mxu0 0.0
    %1256 = vmatprep.subr.mxu0 0.0
    %1257 = vmatpush1.xpose.msra.mxu0 0.0
    %1258 = vmatprep.subr.mxu0 0.0
    %1259 = vmatpush1.xpose.msra.mxu0 0.0
    %1260 = vmatprep.subr.mxu0 0.0
    %1261 = vmatpush1.xpose.msra.mxu0 0.0
    %1262 = vmatprep.subr.mxu0 0.0
    %1263 = vmatpush1.xpose.msra.mxu0 0.0
    %1264 = vmatprep.subr.mxu0 0.0
    %1265 = vmatpush1.xpose.msra.mxu0 0.0
    %1266 = vmatprep.subr.mxu0 0.0
    %1267 = vmatpush1.xpose.msra.mxu0 0.0
    %1268 = vmatprep.subr.mxu0 0.0
    %1269 = vmatpush1.xpose.msra.mxu0 0.0
    %1270 = vmatprep.subr.mxu0 0.0
    %1271 = vmatpush1.xpose.msra.mxu0 0.0
    %1272 = vmatprep.subr.mxu0 0.0
    %1273 = vmatpush1.xpose.msra.mxu0 0.0
    %1274 = vmatprep.subr.mxu0 0.0
    %1275 = vmatpush1.xpose.msra.mxu0 0.0
    %1276 = vmatprep.subr.mxu0 0.0
    %1277 = vmatpush1.xpose.msra.mxu0 0.0
    %1278 = vmatprep.subr.mxu0 0.0
    %1279 = vmatpush1.xpose.msra.mxu0 0.0
    %1280 = vmatprep.subr.mxu0 0.0
    %1281 = vmatpush1.xpose.msra.mxu0 0.0
    %1282 = vmatprep.subr.mxu0 0.0
    %1283 = vmatpush1.xpose.msra.mxu0 0.0
    %1284 = vmatprep.subr.mxu0 0.0
    %1285 = vmatpush1.xpose.msra.mxu0 0.0
    %1286 = vmatprep.subr.mxu0 0.0
    %1287 = vmatpush1.xpose.msra.mxu0 0.0
    %1288 = vmatprep.mubr.f32.mxu0 0.0
    %1289 = vmatmul.mubr.f32.gmra.mrb[0].mxu0 %v1220
    %v1290 = vpop.f32.mrb[0].mxu0
    %v1291 = vadd.f32 0.0, %v1290
    %v1292 = vpop.f32.mrb[0].mxu0
    %1293 = vmatprep.mubr.f32.mxu0 0.0
    %1294 = vmatmul.mubr.f32.gmra.mrb[0].mxu0 %v1222
    %v1295 = vpop.f32.mrb[0].mxu0
    %v1296 = vadd.f32 0.0, %v1295
    %v1297 = vpop.f32.mrb[0].mxu0
    %1298 = vdwg.mxu0
    %1299 = vrot.lane.b32.xlu0 %v386, 112
    %v1300 = vpop.permute.xlu0 %1299
    %1301 = vrot.lane.b32.xlu0 %v391, 112
    %v1302 = vpop.permute.xlu0 %1301
    %1303 = vrot.lane.b32.xlu0 %v485, 112
    %v1304 = vpop.permute.xlu0 %1303
    %1305 = vrot.lane.b32.xlu0 %v490, 112
    %v1306 = vpop.permute.xlu0 %1305
    %v1307 = vsel %vm589, %v1300, 0
    %v1309 = vsel %vm589, %v1302, 0
    %v1311 = vsel %vm589, %v1304, 0
    %v1313 = vsel %vm589, %v1306, 0
    %1315 = vmatprep.subr.mxu0 0.0
    %1316 = vmatpush1.xpose.msra.mxu0 %v1311
    %1317 = vmatprep.subr.mxu0 0.0
    %1318 = vmatpush1.xpose.msra.mxu0 %v1313
    %1319 = vmatprep.subr.mxu0 0.0
    %1320 = vmatpush1.xpose.msra.mxu0 0.0
    %1321 = vmatprep.subr.mxu0 0.0
    %1322 = vmatpush1.xpose.msra.mxu0 0.0
    %1323 = vmatprep.subr.mxu0 0.0
    %1324 = vmatpush1.xpose.msra.mxu0 0.0
    %1325 = vmatprep.subr.mxu0 0.0
    %1326 = vmatpush1.xpose.msra.mxu0 0.0
    %1327 = vmatprep.subr.mxu0 0.0
    %1328 = vmatpush1.xpose.msra.mxu0 0.0
    %1329 = vmatprep.subr.mxu0 0.0
    %1330 = vmatpush1.xpose.msra.mxu0 0.0
    %1331 = vmatprep.subr.mxu0 0.0
    %1332 = vmatpush1.xpose.msra.mxu0 0.0
    %1333 = vmatprep.subr.mxu0 0.0
    %1334 = vmatpush1.xpose.msra.mxu0 0.0
    %1335 = vmatprep.subr.mxu0 0.0
    %1336 = vmatpush1.xpose.msra.mxu0 0.0
    %1337 = vmatprep.subr.mxu0 0.0
    %1338 = vmatpush1.xpose.msra.mxu0 0.0
    %1339 = vmatprep.subr.mxu0 0.0
    %1340 = vmatpush1.xpose.msra.mxu0 0.0
    %1341 = vmatprep.subr.mxu0 0.0
    %1342 = vmatpush1.xpose.msra.mxu0 0.0
    %1343 = vmatprep.subr.mxu0 0.0
    %1344 = vmatpush1.xpose.msra.mxu0 0.0
    %1345 = vmatprep.subr.mxu0 0.0
    %1346 = vmatpush1.xpose.msra.mxu0 0.0
    %1347 = vmatprep.subr.mxu0 0.0
    %1348 = vmatpush1.xpose.msra.mxu0 0.0
    %1349 = vmatprep.subr.mxu0 0.0
    %1350 = vmatpush1.xpose.msra.mxu0 0.0
    %1351 = vmatprep.subr.mxu0 0.0
    %1352 = vmatpush1.xpose.msra.mxu0 0.0
    %1353 = vmatprep.subr.mxu0 0.0
    %1354 = vmatpush1.xpose.msra.mxu0 0.0
    %1355 = vmatprep.subr.mxu0 0.0
    %1356 = vmatpush1.xpose.msra.mxu0 0.0
    %1357 = vmatprep.subr.mxu0 0.0
    %1358 = vmatpush1.xpose.msra.mxu0 0.0
    %1359 = vmatprep.subr.mxu0 0.0
    %1360 = vmatpush1.xpose.msra.mxu0 0.0
    %1361 = vmatprep.subr.mxu0 0.0
    %1362 = vmatpush1.xpose.msra.mxu0 0.0
    %1363 = vmatprep.subr.mxu0 0.0
    %1364 = vmatpush1.xpose.msra.mxu0 0.0
    %1365 = vmatprep.subr.mxu0 0.0
    %1366 = vmatpush1.xpose.msra.mxu0 0.0
    %1367 = vmatprep.subr.mxu0 0.0
    %1368 = vmatpush1.xpose.msra.mxu0 0.0
    %1369 = vmatprep.subr.mxu0 0.0
    %1370 = vmatpush1.xpose.msra.mxu0 0.0
    %1371 = vmatprep.subr.mxu0 0.0
    %1372 = vmatpush1.xpose.msra.mxu0 0.0
    %1373 = vmatprep.subr.mxu0 0.0
    %1374 = vmatpush1.xpose.msra.mxu0 0.0
    %1375 = vmatprep.subr.mxu0 0.0
    %1376 = vmatpush1.xpose.msra.mxu0 0.0
    %1377 = vmatprep.subr.mxu0 0.0
    %1378 = vmatpush1.xpose.msra.mxu0 0.0
    %1379 = vmatprep.mubr.f32.mxu0 0.0
    %1380 = vmatmul.mubr.f32.gmra.mrb[0].mxu0 %v1307
    %v1381 = vpop.f32.mrb[0].mxu0
    %v1382 = vadd.f32 %v1291, %v1381
    %v1383 = vpop.f32.mrb[0].mxu0
    %1384 = vmatprep.mubr.f32.mxu0 0.0
    %1385 = vmatmul.mubr.f32.gmra.mrb[0].mxu0 %v1309
    %v1386 = vpop.f32.mrb[0].mxu0
    %v1387 = vadd.f32 %v1296, %v1386
    %v1388 = vpop.f32.mrb[0].mxu0
    %1389 = vdwg.mxu0
    %v1390 = vadd.f32 %v1382, %v123
    %v1391 = vadd.f32 %v1387, %v124
    %v1392 = vsel %vm238, %v1390, -inf
    %1393 = vmax.xlane.f32.xlu0 %v1392
    %v1394 = vpop.xlane.xlu0 %1393
    %v1395 = vsel %vm238, %v1391, -inf
    %1396 = vmax.xlane.f32.xlu0 %v1395
    %v1397 = vpop.xlane.xlu0 %1396
    %v1398 = vsub.f32 %v1390, %v1394
    %v1399 = vsub.f32 %v1391, %v1397
    %v1400 = vmul.f32 %v1398, 1.442695
    %v1401 = vpow.pop %v1400
    %v1402 = vmul.f32 %v1399, 1.442695
    %v1403 = vpow.pop %v1402
    %v1404 = vsel %vm238, %v1401, 0.0
    %1405 = vadd.xlane.f32.xlu0 %v1404
    %v1406 = vpop.xlane.xlu0 %1405
    %v1407 = vsel %vm238, %v1403, 0.0
    %1408 = vadd.xlane.f32.xlu0 %v1407
    %v1409 = vpop.xlane.xlu0 %1408
    %v1410 = vrcp.pop %v1406
    %v1411 = vrcp.pop %v1409
    %v1412 = vmul.f32 %v1401, %v1410
    %v1413 = vmul.f32 %v1403, %v1411
    %s1414 = scalar_lea.vmem %s7, 32
    %v1415 = vld [vmem:[%s1414] sm:$0xff]
    %v1416 = vld [vmem:[%s1414 + $0x8] sm:$0xff]
    %1417 = vmatprep.subr.mxu0 0.0
    %1418 = vmatpush1.msra.mxu0 %v1415
    %1419 = vmatprep.subr.mxu0 0.0
    %1420 = vmatpush1.msra.mxu0 %v1416
    %1421 = vmatprep.subr.mxu0 0.0
    %1422 = vmatpush1.msra.mxu0 0.0
    %1423 = vmatprep.subr.mxu0 0.0
    %1424 = vmatpush1.msra.mxu0 0.0
    %1425 = vmatprep.subr.mxu0 0.0
    %1426 = vmatpush1.msra.mxu0 0.0
    %1427 = vmatprep.subr.mxu0 0.0
    %1428 = vmatpush1.msra.mxu0 0.0
    %1429 = vmatprep.subr.mxu0 0.0
    %1430 = vmatpush1.msra.mxu0 0.0
    %1431 = vmatprep.subr.mxu0 0.0
    %1432 = vmatpush1.msra.mxu0 0.0
    %1433 = vmatprep.subr.mxu0 0.0
    %1434 = vmatpush1.msra.mxu0 0.0
    %1435 = vmatprep.subr.mxu0 0.0
    %1436 = vmatpush1.msra.mxu0 0.0
    %1437 = vmatprep.subr.mxu0 0.0
    %1438 = vmatpush1.msra.mxu0 0.0
    %1439 = vmatprep.subr.mxu0 0.0
    %1440 = vmatpush1.msra.mxu0 0.0
    %1441 = vmatprep.subr.mxu0 0.0
    %1442 = vmatpush1.msra.mxu0 0.0
    %1443 = vmatprep.subr.mxu0 0.0
    %1444 = vmatpush1.msra.mxu0 0.0
    %1445 = vmatprep.subr.mxu0 0.0
    %1446 = vmatpush1.msra.mxu0 0.0
    %1447 = vmatprep.subr.mxu0 0.0
    %1448 = vmatpush1.msra.mxu0 0.0
    %1449 = vmatprep.subr.mxu0 0.0
    %1450 = vmatpush1.msra.mxu0 0.0
    %1451 = vmatprep.subr.mxu0 0.0
    %1452 = vmatpush1.msra.mxu0 0.0
    %1453 = vmatprep.subr.mxu0 0.0
    %1454 = vmatpush1.msra.mxu0 0.0
    %1455 = vmatprep.subr.mxu0 0.0
    %1456 = vmatpush1.msra.mxu0 0.0
    %1457 = vmatprep.subr.mxu0 0.0
    %1458 = vmatpush1.msra.mxu0 0.0
    %1459 = vmatprep.subr.mxu0 0.0
    %1460 = vmatpush1.msra.mxu0 0.0
    %1461 = vmatprep.subr.mxu0 0.0
    %1462 = vmatpush1.msra.mxu0 0.0
    %1463 = vmatprep.subr.mxu0 0.0
    %1464 = vmatpush1.msra.mxu0 0.0
    %1465 = vmatprep.subr.mxu0 0.0
    %1466 = vmatpush1.msra.mxu0 0.0
    %1467 = vmatprep.subr.mxu0 0.0
    %1468 = vmatpush1.msra.mxu0 0.0
    %1469 = vmatprep.subr.mxu0 0.0
    %1470 = vmatpush1.msra.mxu0 0.0
    %1471 = vmatprep.subr.mxu0 0.0
    %1472 = vmatpush1.msra.mxu0 0.0
    %1473 = vmatprep.subr.mxu0 0.0
    %1474 = vmatpush1.msra.mxu0 0.0
    %1475 = vmatprep.subr.mxu0 0.0
    %1476 = vmatpush1.msra.mxu0 0.0
    %1477 = vmatprep.subr.mxu0 0.0
    %1478 = vmatpush1.msra.mxu0 0.0
    %1479 = vmatprep.subr.mxu0 0.0
    %1480 = vmatpush1.msra.mxu0 0.0
    %1481 = vmatprep.mubr.f32.mxu0 0.0
    %1482 = vmatmul.mubr.f32.gmra.mrb[0].mxu0 %v414
    %v1483 = vpop.f32.mrb[0].mxu0
    %v1484 = vadd.f32 0.0, %v1483
    %v1485 = vpop.f32.mrb[0].mxu0
    %1486 = vmatprep.mubr.f32.mxu0 0.0
    %1487 = vmatmul.mubr.f32.gmra.mrb[0].mxu0 %v416
    %v1488 = vpop.f32.mrb[0].mxu0
    %v1489 = vadd.f32 0.0, %v1488
    %v1490 = vpop.f32.mrb[0].mxu0
    %1491 = vdwg.mxu0
    %v1493 = vsel %vm238, %v1412, 0
    %v1496 = vsel %vm238, %v1413, 0
    %1498 = vmatprep.subr.mxu0 0.0
    %1499 = vmatpush1.msra.mxu0 %v1484
    %1500 = vmatprep.subr.mxu0 0.0
    %1501 = vmatpush1.msra.mxu0 %v1489
    %1502 = vmatprep.subr.mxu0 0.0
    %1503 = vmatpush1.msra.mxu0 0.0
    %1504 = vmatprep.subr.mxu0 0.0
    %1505 = vmatpush1.msra.mxu0 0.0
    %1506 = vmatprep.subr.mxu0 0.0
    %1507 = vmatpush1.msra.mxu0 0.0
    %1508 = vmatprep.subr.mxu0 0.0
    %1509 = vmatpush1.msra.mxu0 0.0
    %1510 = vmatprep.subr.mxu0 0.0
    %1511 = vmatpush1.msra.mxu0 0.0
    %1512 = vmatprep.subr.mxu0 0.0
    %1513 = vmatpush1.msra.mxu0 0.0
    %1514 = vmatprep.subr.mxu0 0.0
    %1515 = vmatpush1.msra.mxu0 0.0
    %1516 = vmatprep.subr.mxu0 0.0
    %1517 = vmatpush1.msra.mxu0 0.0
    %1518 = vmatprep.subr.mxu0 0.0
    %1519 = vmatpush1.msra.mxu0 0.0
    %1520 = vmatprep.subr.mxu0 0.0
    %1521 = vmatpush1.msra.mxu0 0.0
    %1522 = vmatprep.subr.mxu0 0.0
    %1523 = vmatpush1.msra.mxu0 0.0
    %1524 = vmatprep.subr.mxu0 0.0
    %1525 = vmatpush1.msra.mxu0 0.0
    %1526 = vmatprep.subr.mxu0 0.0
    %1527 = vmatpush1.msra.mxu0 0.0
    %1528 = vmatprep.subr.mxu0 0.0
    %1529 = vmatpush1.msra.mxu0 0.0
    %1530 = vmatprep.subr.mxu0 0.0
    %1531 = vmatpush1.msra.mxu0 0.0
    %1532 = vmatprep.subr.mxu0 0.0
    %1533 = vmatpush1.msra.mxu0 0.0
    %1534 = vmatprep.subr.mxu0 0.0
    %1535 = vmatpush1.msra.mxu0 0.0
    %1536 = vmatprep.subr.mxu0 0.0
    %1537 = vmatpush1.msra.mxu0 0.0
    %1538 = vmatprep.subr.mxu0 0.0
    %1539 = vmatpush1.msra.mxu0 0.0
    %1540 = vmatprep.subr.mxu0 0.0
    %1541 = vmatpush1.msra.mxu0 0.0
    %1542 = vmatprep.subr.mxu0 0.0
    %1543 = vmatpush1.msra.mxu0 0.0
    %1544 = vmatprep.subr.mxu0 0.0
    %1545 = vmatpush1.msra.mxu0 0.0
    %1546 = vmatprep.subr.mxu0 0.0
    %1547 = vmatpush1.msra.mxu0 0.0
    %1548 = vmatprep.subr.mxu0 0.0
    %1549 = vmatpush1.msra.mxu0 0.0
    %1550 = vmatprep.subr.mxu0 0.0
    %1551 = vmatpush1.msra.mxu0 0.0
    %1552 = vmatprep.subr.mxu0 0.0
    %1553 = vmatpush1.msra.mxu0 0.0
    %1554 = vmatprep.subr.mxu0 0.0
    %1555 = vmatpush1.msra.mxu0 0.0
    %1556 = vmatprep.subr.mxu0 0.0
    %1557 = vmatpush1.msra.mxu0 0.0
    %1558 = vmatprep.subr.mxu0 0.0
    %1559 = vmatpush1.msra.mxu0 0.0
    %1560 = vmatprep.subr.mxu0 0.0
    %1561 = vmatpush1.msra.mxu0 0.0
    %1562 = vmatprep.mubr.f32.mxu0 0.0
    %1563 = vmatmul.mubr.f32.gmra.mrb[0].mxu0 %v1493
    %v1564 = vpop.f32.mrb[0].mxu0
    %v1565 = vadd.f32 0.0, %v1564
    %v1566 = vpop.f32.mrb[0].mxu0
    %1567 = vmatprep.mubr.f32.mxu0 0.0
    %1568 = vmatmul.mubr.f32.gmra.mrb[0].mxu0 %v1496
    %v1569 = vpop.f32.mrb[0].mxu0
    %v1570 = vadd.f32 0.0, %v1569
    %v1571 = vpop.f32.mrb[0].mxu0
    %1572 = vdwg.mxu0
    %v1573 = vadd.f32 %v1208, %v1565
    %v1574 = vadd.f32 %v1213, %v1570
    %1575 = vrot.lane.b32.xlu0 %v404, 84
    %v1576 = vpop.permute.xlu0 %1575
    %1577 = vrot.lane.b32.xlu0 %v405, 84
    %v1578 = vpop.permute.xlu0 %1577
    %v1579 = vsel %vm505, %v1576, 0
    %v1581 = vsel %vm505, %v1578, 0
    %1583 = vmatprep.subr.mxu0 0.0
    %1584 = vmatpush1.xpose.msra.mxu0 %v510
    %1585 = vmatprep.subr.mxu0 0.0
    %1586 = vmatpush1.xpose.msra.mxu0 %v512
    %1587 = vmatprep.subr.mxu0 0.0
    %1588 = vmatpush1.xpose.msra.mxu0 0.0
    %1589 = vmatprep.subr.mxu0 0.0
    %1590 = vmatpush1.xpose.msra.mxu0 0.0
    %1591 = vmatprep.subr.mxu0 0.0
    %1592 = vmatpush1.xpose.msra.mxu0 0.0
    %1593 = vmatprep.subr.mxu0 0.0
    %1594 = vmatpush1.xpose.msra.mxu0 0.0
    %1595 = vmatprep.subr.mxu0 0.0
    %1596 = vmatpush1.xpose.msra.mxu0 0.0
    %1597 = vmatprep.subr.mxu0 0.0
    %1598 = vmatpush1.xpose.msra.mxu0 0.0
    %1599 = vmatprep.subr.mxu0 0.0
    %1600 = vmatpush1.xpose.msra.mxu0 0.0
    %1601 = vmatprep.subr.mxu0 0.0
    %1602 = vmatpush1.xpose.msra.mxu0 0.0
    %1603 = vmatprep.subr.mxu0 0.0
    %1604 = vmatpush1.xpose.msra.mxu0 0.0
    %1605 = vmatprep.subr.mxu0 0.0
    %1606 = vmatpush1.xpose.msra.mxu0 0.0
    %1607 = vmatprep.subr.mxu0 0.0
    %1608 = vmatpush1.xpose.msra.mxu0 0.0
    %1609 = vmatprep.subr.mxu0 0.0
    %1610 = vmatpush1.xpose.msra.mxu0 0.0
    %1611 = vmatprep.subr.mxu0 0.0
    %1612 = vmatpush1.xpose.msra.mxu0 0.0
    %1613 = vmatprep.subr.mxu0 0.0
    %1614 = vmatpush1.xpose.msra.mxu0 0.0
    %1615 = vmatprep.subr.mxu0 0.0
    %1616 = vmatpush1.xpose.msra.mxu0 0.0
    %1617 = vmatprep.subr.mxu0 0.0
    %1618 = vmatpush1.xpose.msra.mxu0 0.0
    %1619 = vmatprep.subr.mxu0 0.0
    %1620 = vmatpush1.xpose.msra.mxu0 0.0
    %1621 = vmatprep.subr.mxu0 0.0
    %1622 = vmatpush1.xpose.msra.mxu0 0.0
    %1623 = vmatprep.subr.mxu0 0.0
    %1624 = vmatpush1.xpose.msra.mxu0 0.0
    %1625 = vmatprep.subr.mxu0 0.0
    %1626 = vmatpush1.xpose.msra.mxu0 0.0
    %1627 = vmatprep.subr.mxu0 0.0
    %1628 = vmatpush1.xpose.msra.mxu0 0.0
    %1629 = vmatprep.subr.mxu0 0.0
    %1630 = vmatpush1.xpose.msra.mxu0 0.0
    %1631 = vmatprep.subr.mxu0 0.0
    %1632 = vmatpush1.xpose.msra.mxu0 0.0
    %1633 = vmatprep.subr.mxu0 0.0
    %1634 = vmatpush1.xpose.msra.mxu0 0.0
    %1635 = vmatprep.subr.mxu0 0.0
    %1636 = vmatpush1.xpose.msra.mxu0 0.0
    %1637 = vmatprep.subr.mxu0 0.0
    %1638 = vmatpush1.xpose.msra.mxu0 0.0
    %1639 = vmatprep.subr.mxu0 0.0
    %1640 = vmatpush1.xpose.msra.mxu0 0.0
    %1641 = vmatprep.subr.mxu0 0.0
    %1642 = vmatpush1.xpose.msra.mxu0 0.0
    %1643 = vmatprep.subr.mxu0 0.0
    %1644 = vmatpush1.xpose.msra.mxu0 0.0
    %1645 = vmatprep.subr.mxu0 0.0
    %1646 = vmatpush1.xpose.msra.mxu0 0.0
    %1647 = vmatprep.mubr.f32.mxu0 0.0
    %1648 = vmatmul.mubr.f32.gmra.mrb[0].mxu0 %v1579
    %v1649 = vpop.f32.mrb[0].mxu0
    %v1650 = vadd.f32 0.0, %v1649
    %v1651 = vpop.f32.mrb[0].mxu0
    %1652 = vmatprep.mubr.f32.mxu0 0.0
    %1653 = vmatmul.mubr.f32.gmra.mrb[0].mxu0 %v1581
    %v1654 = vpop.f32.mrb[0].mxu0
    %v1655 = vadd.f32 0.0, %v1654
    %v1656 = vpop.f32.mrb[0].mxu0
    %1657 = vdwg.mxu0
    %1658 = vrot.lane.b32.xlu0 %v386, 104
    %v1659 = vpop.permute.xlu0 %1658
    %1660 = vrot.lane.b32.xlu0 %v391, 104
    %v1661 = vpop.permute.xlu0 %1660
    %1662 = vrot.lane.b32.xlu0 %v485, 104
    %v1663 = vpop.permute.xlu0 %1662
    %1664 = vrot.lane.b32.xlu0 %v490, 104
    %v1665 = vpop.permute.xlu0 %1664
    %v1666 = vsel %vm589, %v1659, 0
    %v1668 = vsel %vm589, %v1661, 0
    %v1670 = vsel %vm589, %v1663, 0
    %v1672 = vsel %vm589, %v1665, 0
    %1674 = vmatprep.subr.mxu0 0.0
    %1675 = vmatpush1.xpose.msra.mxu0 %v1670
    %1676 = vmatprep.subr.mxu0 0.0
    %1677 = vmatpush1.xpose.msra.mxu0 %v1672
    %1678 = vmatprep.subr.mxu0 0.0
    %1679 = vmatpush1.xpose.msra.mxu0 0.0
    %1680 = vmatprep.subr.mxu0 0.0
    %1681 = vmatpush1.xpose.msra.mxu0 0.0
    %1682 = vmatprep.subr.mxu0 0.0
    %1683 = vmatpush1.xpose.msra.mxu0 0.0
    %1684 = vmatprep.subr.mxu0 0.0
    %1685 = vmatpush1.xpose.msra.mxu0 0.0
    %1686 = vmatprep.subr.mxu0 0.0
    %1687 = vmatpush1.xpose.msra.mxu0 0.0
    %1688 = vmatprep.subr.mxu0 0.0
    %1689 = vmatpush1.xpose.msra.mxu0 0.0
    %1690 = vmatprep.subr.mxu0 0.0
    %1691 = vmatpush1.xpose.msra.mxu0 0.0
    %1692 = vmatprep.subr.mxu0 0.0
    %1693 = vmatpush1.xpose.msra.mxu0 0.0
    %1694 = vmatprep.subr.mxu0 0.0
    %1695 = vmatpush1.xpose.msra.mxu0 0.0
    %1696 = vmatprep.subr.mxu0 0.0
    %1697 = vmatpush1.xpose.msra.mxu0 0.0
    %1698 = vmatprep.subr.mxu0 0.0
    %1699 = vmatpush1.xpose.msra.mxu0 0.0
    %1700 = vmatprep.subr.mxu0 0.0
    %1701 = vmatpush1.xpose.msra.mxu0 0.0
    %1702 = vmatprep.subr.mxu0 0.0
    %1703 = vmatpush1.xpose.msra.mxu0 0.0
    %1704 = vmatprep.subr.mxu0 0.0
    %1705 = vmatpush1.xpose.msra.mxu0 0.0
    %1706 = vmatprep.subr.mxu0 0.0
    %1707 = vmatpush1.xpose.msra.mxu0 0.0
    %1708 = vmatprep.subr.mxu0 0.0
    %1709 = vmatpush1.xpose.msra.mxu0 0.0
    %1710 = vmatprep.subr.mxu0 0.0
    %1711 = vmatpush1.xpose.msra.mxu0 0.0
    %1712 = vmatprep.subr.mxu0 0.0
    %1713 = vmatpush1.xpose.msra.mxu0 0.0
    %1714 = vmatprep.subr.mxu0 0.0
    %1715 = vmatpush1.xpose.msra.mxu0 0.0
    %1716 = vmatprep.subr.mxu0 0.0
    %1717 = vmatpush1.xpose.msra.mxu0 0.0
    %1718 = vmatprep.subr.mxu0 0.0
    %1719 = vmatpush1.xpose.msra.mxu0 0.0
    %1720 = vmatprep.subr.mxu0 0.0
    %1721 = vmatpush1.xpose.msra.mxu0 0.0
    %1722 = vmatprep.subr.mxu0 0.0
    %1723 = vmatpush1.xpose.msra.mxu0 0.0
    %1724 = vmatprep.subr.mxu0 0.0
    %1725 = vmatpush1.xpose.msra.mxu0 0.0
    %1726 = vmatprep.subr.mxu0 0.0
    %1727 = vmatpush1.xpose.msra.mxu0 0.0
    %1728 = vmatprep.subr.mxu0 0.0
    %1729 = vmatpush1.xpose.msra.mxu0 0.0
    %1730 = vmatprep.subr.mxu0 0.0
    %1731 = vmatpush1.xpose.msra.mxu0 0.0
    %1732 = vmatprep.subr.mxu0 0.0
    %1733 = vmatpush1.xpose.msra.mxu0 0.0
    %1734 = vmatprep.subr.mxu0 0.0
    %1735 = vmatpush1.xpose.msra.mxu0 0.0
    %1736 = vmatprep.subr.mxu0 0.0
    %1737 = vmatpush1.xpose.msra.mxu0 0.0
    %1738 = vmatprep.mubr.f32.mxu0 0.0
    %1739 = vmatmul.mubr.f32.gmra.mrb[0].mxu0 %v1666
    %v1740 = vpop.f32.mrb[0].mxu0
    %v1741 = vadd.f32 %v1650, %v1740
    %v1742 = vpop.f32.mrb[0].mxu0
    %1743 = vmatprep.mubr.f32.mxu0 0.0
    %1744 = vmatmul.mubr.f32.gmra.mrb[0].mxu0 %v1668
    %v1745 = vpop.f32.mrb[0].mxu0
    %v1746 = vadd.f32 %v1655, %v1745
    %v1747 = vpop.f32.mrb[0].mxu0
    %1748 = vdwg.mxu0
    %v1749 = vadd.f32 %v1741, %v123
    %v1750 = vadd.f32 %v1746, %v124
    %v1751 = vsel %vm238, %v1749, -inf
    %1752 = vmax.xlane.f32.xlu0 %v1751
    %v1753 = vpop.xlane.xlu0 %1752
    %v1754 = vsel %vm238, %v1750, -inf
    %1755 = vmax.xlane.f32.xlu0 %v1754
    %v1756 = vpop.xlane.xlu0 %1755
    %v1757 = vsub.f32 %v1749, %v1753
    %v1758 = vsub.f32 %v1750, %v1756
    %v1759 = vmul.f32 %v1757, 1.442695
    %v1760 = vpow.pop %v1759
    %v1761 = vmul.f32 %v1758, 1.442695
    %v1762 = vpow.pop %v1761
    %v1763 = vsel %vm238, %v1760, 0.0
    %1764 = vadd.xlane.f32.xlu0 %v1763
    %v1765 = vpop.xlane.xlu0 %1764
    %v1766 = vsel %vm238, %v1762, 0.0
    %1767 = vadd.xlane.f32.xlu0 %v1766
    %v1768 = vpop.xlane.xlu0 %1767
    %v1769 = vrcp.pop %v1765
    %v1770 = vrcp.pop %v1768
    %v1771 = vmul.f32 %v1760, %v1769
    %v1772 = vmul.f32 %v1762, %v1770
    %s1773 = scalar_lea.vmem %s7, 48
    %v1774 = vld [vmem:[%s1773] sm:$0xff]
    %v1775 = vld [vmem:[%s1773 + $0x8] sm:$0xff]
    %1776 = vmatprep.subr.mxu0 0.0
    %1777 = vmatpush1.msra.mxu0 %v1774
    %1778 = vmatprep.subr.mxu0 0.0
    %1779 = vmatpush1.msra.mxu0 %v1775
    %1780 = vmatprep.subr.mxu0 0.0
    %1781 = vmatpush1.msra.mxu0 0.0
    %1782 = vmatprep.subr.mxu0 0.0
    %1783 = vmatpush1.msra.mxu0 0.0
    %1784 = vmatprep.subr.mxu0 0.0
    %1785 = vmatpush1.msra.mxu0 0.0
    %1786 = vmatprep.subr.mxu0 0.0
    %1787 = vmatpush1.msra.mxu0 0.0
    %1788 = vmatprep.subr.mxu0 0.0
    %1789 = vmatpush1.msra.mxu0 0.0
    %1790 = vmatprep.subr.mxu0 0.0
    %1791 = vmatpush1.msra.mxu0 0.0
    %1792 = vmatprep.subr.mxu0 0.0
    %1793 = vmatpush1.msra.mxu0 0.0
    %1794 = vmatprep.subr.mxu0 0.0
    %1795 = vmatpush1.msra.mxu0 0.0
    %1796 = vmatprep.subr.mxu0 0.0
    %1797 = vmatpush1.msra.mxu0 0.0
    %1798 = vmatprep.subr.mxu0 0.0
    %1799 = vmatpush1.msra.mxu0 0.0
    %1800 = vmatprep.subr.mxu0 0.0
    %1801 = vmatpush1.msra.mxu0 0.0
    %1802 = vmatprep.subr.mxu0 0.0
    %1803 = vmatpush1.msra.mxu0 0.0
    %1804 = vmatprep.subr.mxu0 0.0
    %1805 = vmatpush1.msra.mxu0 0.0
    %1806 = vmatprep.subr.mxu0 0.0
    %1807 = vmatpush1.msra.mxu0 0.0
    %1808 = vmatprep.subr.mxu0 0.0
    %1809 = vmatpush1.msra.mxu0 0.0
    %1810 = vmatprep.subr.mxu0 0.0
    %1811 = vmatpush1.msra.mxu0 0.0
    %1812 = vmatprep.subr.mxu0 0.0
    %1813 = vmatpush1.msra.mxu0 0.0
    %1814 = vmatprep.subr.mxu0 0.0
    %1815 = vmatpush1.msra.mxu0 0.0
    %1816 = vmatprep.subr.mxu0 0.0
    %1817 = vmatpush1.msra.mxu0 0.0
    %1818 = vmatprep.subr.mxu0 0.0
    %1819 = vmatpush1.msra.mxu0 0.0
    %1820 = vmatprep.subr.mxu0 0.0
    %1821 = vmatpush1.msra.mxu0 0.0
    %1822 = vmatprep.subr.mxu0 0.0
    %1823 = vmatpush1.msra.mxu0 0.0
    %1824 = vmatprep.subr.mxu0 0.0
    %1825 = vmatpush1.msra.mxu0 0.0
    %1826 = vmatprep.subr.mxu0 0.0
    %1827 = vmatpush1.msra.mxu0 0.0
    %1828 = vmatprep.subr.mxu0 0.0
    %1829 = vmatpush1.msra.mxu0 0.0
    %1830 = vmatprep.subr.mxu0 0.0
    %1831 = vmatpush1.msra.mxu0 0.0
    %1832 = vmatprep.subr.mxu0 0.0
    %1833 = vmatpush1.msra.mxu0 0.0
    %1834 = vmatprep.subr.mxu0 0.0
    %1835 = vmatpush1.msra.mxu0 0.0
    %1836 = vmatprep.subr.mxu0 0.0
    %1837 = vmatpush1.msra.mxu0 0.0
    %1838 = vmatprep.subr.mxu0 0.0
    %1839 = vmatpush1.msra.mxu0 0.0
    %1840 = vmatprep.mubr.f32.mxu0 0.0
    %1841 = vmatmul.mubr.f32.gmra.mrb[0].mxu0 %v414
    %v1842 = vpop.f32.mrb[0].mxu0
    %v1843 = vadd.f32 0.0, %v1842
    %v1844 = vpop.f32.mrb[0].mxu0
    %1845 = vmatprep.mubr.f32.mxu0 0.0
    %1846 = vmatmul.mubr.f32.gmra.mrb[0].mxu0 %v416
    %v1847 = vpop.f32.mrb[0].mxu0
    %v1848 = vadd.f32 0.0, %v1847
    %v1849 = vpop.f32.mrb[0].mxu0
    %1850 = vdwg.mxu0
    %v1852 = vsel %vm238, %v1771, 0
    %v1855 = vsel %vm238, %v1772, 0
    %1857 = vmatprep.subr.mxu0 0.0
    %1858 = vmatpush1.msra.mxu0 %v1843
    %1859 = vmatprep.subr.mxu0 0.0
    %1860 = vmatpush1.msra.mxu0 %v1848
    %1861 = vmatprep.subr.mxu0 0.0
    %1862 = vmatpush1.msra.mxu0 0.0
    %1863 = vmatprep.subr.mxu0 0.0
    %1864 = vmatpush1.msra.mxu0 0.0
    %1865 = vmatprep.subr.mxu0 0.0
    %1866 = vmatpush1.msra.mxu0 0.0
    %1867 = vmatprep.subr.mxu0 0.0
    %1868 = vmatpush1.msra.mxu0 0.0
    %1869 = vmatprep.subr.mxu0 0.0
    %1870 = vmatpush1.msra.mxu0 0.0
    %1871 = vmatprep.subr.mxu0 0.0
    %1872 = vmatpush1.msra.mxu0 0.0
    %1873 = vmatprep.subr.mxu0 0.0
    %1874 = vmatpush1.msra.mxu0 0.0
    %1875 = vmatprep.subr.mxu0 0.0
    %1876 = vmatpush1.msra.mxu0 0.0
    %1877 = vmatprep.subr.mxu0 0.0
    %1878 = vmatpush1.msra.mxu0 0.0
    %1879 = vmatprep.subr.mxu0 0.0
    %1880 = vmatpush1.msra.mxu0 0.0
    %1881 = vmatprep.subr.mxu0 0.0
    %1882 = vmatpush1.msra.mxu0 0.0
    %1883 = vmatprep.subr.mxu0 0.0
    %1884 = vmatpush1.msra.mxu0 0.0
    %1885 = vmatprep.subr.mxu0 0.0
    %1886 = vmatpush1.msra.mxu0 0.0
    %1887 = vmatprep.subr.mxu0 0.0
    %1888 = vmatpush1.msra.mxu0 0.0
    %1889 = vmatprep.subr.mxu0 0.0
    %1890 = vmatpush1.msra.mxu0 0.0
    %1891 = vmatprep.subr.mxu0 0.0
    %1892 = vmatpush1.msra.mxu0 0.0
    %1893 = vmatprep.subr.mxu0 0.0
    %1894 = vmatpush1.msra.mxu0 0.0
    %1895 = vmatprep.subr.mxu0 0.0
    %1896 = vmatpush1.msra.mxu0 0.0
    %1897 = vmatprep.subr.mxu0 0.0
    %1898 = vmatpush1.msra.mxu0 0.0
    %1899 = vmatprep.subr.mxu0 0.0
    %1900 = vmatpush1.msra.mxu0 0.0
    %1901 = vmatprep.subr.mxu0 0.0
    %1902 = vmatpush1.msra.mxu0 0.0
    %1903 = vmatprep.subr.mxu0 0.0
    %1904 = vmatpush1.msra.mxu0 0.0
    %1905 = vmatprep.subr.mxu0 0.0
    %1906 = vmatpush1.msra.mxu0 0.0
    %1907 = vmatprep.subr.mxu0 0.0
    %1908 = vmatpush1.msra.mxu0 0.0
    %1909 = vmatprep.subr.mxu0 0.0
    %1910 = vmatpush1.msra.mxu0 0.0
    %1911 = vmatprep.subr.mxu0 0.0
    %1912 = vmatpush1.msra.mxu0 0.0
    %1913 = vmatprep.subr.mxu0 0.0
    %1914 = vmatpush1.msra.mxu0 0.0
    %1915 = vmatprep.subr.mxu0 0.0
    %1916 = vmatpush1.msra.mxu0 0.0
    %1917 = vmatprep.subr.mxu0 0.0
    %1918 = vmatpush1.msra.mxu0 0.0
    %1919 = vmatprep.subr.mxu0 0.0
    %1920 = vmatpush1.msra.mxu0 0.0
    %1921 = vmatprep.mubr.f32.mxu0 0.0
    %1922 = vmatmul.mubr.f32.gmra.mrb[0].mxu0 %v1852
    %v1923 = vpop.f32.mrb[0].mxu0
    %v1924 = vadd.f32 0.0, %v1923
    %v1925 = vpop.f32.mrb[0].mxu0
    %1926 = vmatprep.mubr.f32.mxu0 0.0
    %1927 = vmatmul.mubr.f32.gmra.mrb[0].mxu0 %v1855
    %v1928 = vpop.f32.mrb[0].mxu0
    %v1929 = vadd.f32 0.0, %v1928
    %v1930 = vpop.f32.mrb[0].mxu0
    %1931 = vdwg.mxu0
    %v1932 = vadd.f32 %v1573, %v1924
    %v1933 = vadd.f32 %v1574, %v1929
    %v1934 = vadd.f32 %v118, %v1932
    %v1935 = vadd.f32 %v119, %v1933
    %v1936 = vmul.f32 %v1934, %v1934
    %v1937 = vmul.f32 %v1935, %v1935
    %v1938 = vsel %vm127, %v1936, 0.0
    %1939 = vadd.xlane.f32.xlu0 %v1938
    %v1940 = vpop.xlane.xlu0 %1939
    %v1941 = vsel %vm127, %v1937, 0.0
    %1942 = vadd.xlane.f32.xlu0 %v1941
    %v1943 = vpop.xlane.xlu0 %1942
    %v1944 = vmul.f32 %v1940, %v134
    %v1945 = vmul.f32 %v1943, %v134
    %v1946 = vadd.f32 %v1944, 1e-06
    %v1947 = vadd.f32 %v1945, 1e-06
    %v1948 = vrsqrt.pop %v1946
    %v1949 = vrsqrt.pop %v1947
    %v1950 = vmul.f32 %v1934, %v1948
    %v1951 = vmul.f32 %v1935, %v1949
    %1952 = vrot.lane.b32.xlu0 %v147, 96
    %v1953 = vpop.permute.xlu0 %1952
    %v1955 = vmul.f32 %v1950, %v1953
    %v1956 = vmul.f32 %v1951, %v1953
    %v1957 = vld [vmem:[#allocation11] sm:$0xff]
    %v1958 = vld [vmem:[#allocation11 + $0x8] sm:$0xff]
    %v1959 = vld [vmem:[#allocation11 + $0x10] sm:$0xff]
    %v1960 = vld [vmem:[#allocation11 + $0x18] sm:$0xff]
    %v1962 = vsel %vm127, %v1955, 0
    %v1965 = vsel %vm127, %v1956, 0
    %1967 = vmatprep.subr.mxu0 0.0
    %1968 = vmatpush1.msra.mxu0 %v1957
    %1969 = vmatprep.subr.mxu0 0.0
    %1970 = vmatpush1.msra.mxu0 %v1958
    %1971 = vmatprep.subr.mxu0 0.0
    %1972 = vmatpush1.msra.mxu0 %v1959
    %1973 = vmatprep.subr.mxu0 0.0
    %1974 = vmatpush1.msra.mxu0 %v1960
    %1975 = vmatprep.subr.mxu0 0.0
    %1976 = vmatpush1.msra.mxu0 0.0
    %1977 = vmatprep.subr.mxu0 0.0
    %1978 = vmatpush1.msra.mxu0 0.0
    %1979 = vmatprep.subr.mxu0 0.0
    %1980 = vmatpush1.msra.mxu0 0.0
    %1981 = vmatprep.subr.mxu0 0.0
    %1982 = vmatpush1.msra.mxu0 0.0
    %1983 = vmatprep.subr.mxu0 0.0
    %1984 = vmatpush1.msra.mxu0 0.0
    %1985 = vmatprep.subr.mxu0 0.0
    %1986 = vmatpush1.msra.mxu0 0.0
    %1987 = vmatprep.subr.mxu0 0.0
    %1988 = vmatpush1.msra.mxu0 0.0
    %1989 = vmatprep.subr.mxu0 0.0
    %1990 = vmatpush1.msra.mxu0 0.0
    %1991 = vmatprep.subr.mxu0 0.0
    %1992 = vmatpush1.msra.mxu0 0.0
    %1993 = vmatprep.subr.mxu0 0.0
    %1994 = vmatpush1.msra.mxu0 0.0
    %1995 = vmatprep.subr.mxu0 0.0
    %1996 = vmatpush1.msra.mxu0 0.0
    %1997 = vmatprep.subr.mxu0 0.0
    %1998 = vmatpush1.msra.mxu0 0.0
    %1999 = vmatprep.subr.mxu0 0.0
    %2000 = vmatpush1.msra.mxu0 0.0
    %2001 = vmatprep.subr.mxu0 0.0
    %2002 = vmatpush1.msra.mxu0 0.0
    %2003 = vmatprep.subr.mxu0 0.0
    %2004 = vmatpush1.msra.mxu0 0.0
    %2005 = vmatprep.subr.mxu0 0.0
    %2006 = vmatpush1.msra.mxu0 0.0
    %2007 = vmatprep.subr.mxu0 0.0
    %2008 = vmatpush1.msra.mxu0 0.0
    %2009 = vmatprep.subr.mxu0 0.0
    %2010 = vmatpush1.msra.mxu0 0.0
    %2011 = vmatprep.subr.mxu0 0.0
    %2012 = vmatpush1.msra.mxu0 0.0
    %2013 = vmatprep.subr.mxu0 0.0
    %2014 = vmatpush1.msra.mxu0 0.0
    %2015 = vmatprep.subr.mxu0 0.0
    %2016 = vmatpush1.msra.mxu0 0.0
    %2017 = vmatprep.subr.mxu0 0.0
    %2018 = vmatpush1.msra.mxu0 0.0
    %2019 = vmatprep.subr.mxu0 0.0
    %2020 = vmatpush1.msra.mxu0 0.0
    %2021 = vmatprep.subr.mxu0 0.0
    %2022 = vmatpush1.msra.mxu0 0.0
    %2023 = vmatprep.subr.mxu0 0.0
    %2024 = vmatpush1.msra.mxu0 0.0
    %2025 = vmatprep.subr.mxu0 0.0
    %2026 = vmatpush1.msra.mxu0 0.0
    %2027 = vmatprep.subr.mxu0 0.0
    %2028 = vmatpush1.msra.mxu0 0.0
    %2029 = vmatprep.subr.mxu0 0.0
    %2030 = vmatpush1.msra.mxu0 0.0
    %2031 = vmatprep.mubr.f32.mxu0 0.0
    %2032 = vmatmul.mubr.f32.gmra.mrb[0].mxu0 %v1962
    %v2033 = vpop.f32.mrb[0].mxu0
    %v2034 = vadd.f32 0.0, %v2033
    %v2035 = vpop.f32.mrb[0].mxu0
    %2036 = vmatprep.mubr.f32.mxu0 0.0
    %2037 = vmatmul.mubr.f32.gmra.mrb[0].mxu0 %v1965
    %v2038 = vpop.f32.mrb[0].mxu0
    %v2039 = vadd.f32 0.0, %v2038
    %v2040 = vpop.f32.mrb[0].mxu0
    %2041 = vdwg.mxu0
    %v2042 = vxor.u32 %v2034, 2147483648
    %v2043 = vxor.u32 %v2039, 2147483648
    %v2044 = vmul.f32 %v2042, 1.442695
    %v2045 = vpow.pop %v2044
    %v2046 = vmul.f32 %v2043, 1.442695
    %v2047 = vpow.pop %v2046
    %v2048 = vadd.f32 %v2045, 1.0
    %v2049 = vadd.f32 %v2047, 1.0
    %v2050 = vrcp.pop %v2048
    %v2051 = vmul.f32 1.0, %v2050
    %v2052 = vrcp.pop %v2049
    %v2053 = vmul.f32 1.0, %v2052
    %v2054 = vmul.f32 %v2034, %v2051
    %v2055 = vmul.f32 %v2039, %v2053
    %2058 = vrot.lane.b32.xlu0 %v2034, 64
    %v2059 = vpop.permute.xlu0 %2058
    %2060 = vrot.lane.b32.xlu0 %v2039, 64
    %v2061 = vpop.permute.xlu0 %2060
    %v2064 = vmul.f32 %v2054, %v2059
    %v2065 = vmul.f32 %v2055, %v2061
    %v2066 = vld [vmem:[%s9] sm:$0xff]
    %v2067 = vld [vmem:[%s9 + $0x8] sm:$0xff]
    %v2068 = vld [vmem:[%s9 + $0x10] sm:$0xff]
    %v2069 = vld [vmem:[%s9 + $0x18] sm:$0xff]
    %v2070 = vld [vmem:[%s9 + $0x20] sm:$0xff]
    %v2071 = vld [vmem:[%s9 + $0x28] sm:$0xff]
    %v2072 = vld [vmem:[%s9 + $0x30] sm:$0xff]
    %v2073 = vld [vmem:[%s9 + $0x38] sm:$0xff]
    %vm2074 = vcmask 523264
    %v2076 = vsel %vm2074, %v2064, 0
    %v2079 = vsel %vm2074, %v2065, 0
    %2081 = vmatprep.subr.mxu0 0.0
    %2082 = vmatpush1.msra.mxu0 %v2066
    %2083 = vmatprep.subr.mxu0 0.0
    %2084 = vmatpush1.msra.mxu0 %v2067
    %2085 = vmatprep.subr.mxu0 0.0
    %2086 = vmatpush1.msra.mxu0 %v2068
    %2087 = vmatprep.subr.mxu0 0.0
    %2088 = vmatpush1.msra.mxu0 %v2069
    %2089 = vmatprep.subr.mxu0 0.0
    %2090 = vmatpush1.msra.mxu0 %v2070
    %2091 = vmatprep.subr.mxu0 0.0
    %2092 = vmatpush1.msra.mxu0 %v2071
    %2093 = vmatprep.subr.mxu0 0.0
    %2094 = vmatpush1.msra.mxu0 %v2072
    %2095 = vmatprep.subr.mxu0 0.0
    %2096 = vmatpush1.msra.mxu0 %v2073
    %2097 = vmatprep.subr.mxu0 0.0
    %2098 = vmatpush1.msra.mxu0 0.0
    %2099 = vmatprep.subr.mxu0 0.0
    %2100 = vmatpush1.msra.mxu0 0.0
    %2101 = vmatprep.subr.mxu0 0.0
    %2102 = vmatpush1.msra.mxu0 0.0
    %2103 = vmatprep.subr.mxu0 0.0
    %2104 = vmatpush1.msra.mxu0 0.0
    %2105 = vmatprep.subr.mxu0 0.0
    %2106 = vmatpush1.msra.mxu0 0.0
    %2107 = vmatprep.subr.mxu0 0.0
    %2108 = vmatpush1.msra.mxu0 0.0
    %2109 = vmatprep.subr.mxu0 0.0
    %2110 = vmatpush1.msra.mxu0 0.0
    %2111 = vmatprep.subr.mxu0 0.0
    %2112 = vmatpush1.msra.mxu0 0.0
    %2113 = vmatprep.subr.mxu0 0.0
    %2114 = vmatpush1.msra.mxu0 0.0
    %2115 = vmatprep.subr.mxu0 0.0
    %2116 = vmatpush1.msra.mxu0 0.0
    %2117 = vmatprep.subr.mxu0 0.0
    %2118 = vmatpush1.msra.mxu0 0.0
    %2119 = vmatprep.subr.mxu0 0.0
    %2120 = vmatpush1.msra.mxu0 0.0
    %2121 = vmatprep.subr.mxu0 0.0
    %2122 = vmatpush1.msra.mxu0 0.0
    %2123 = vmatprep.subr.mxu0 0.0
    %2124 = vmatpush1.msra.mxu0 0.0
    %2125 = vmatprep.subr.mxu0 0.0
    %2126 = vmatpush1.msra.mxu0 0.0
    %2127 = vmatprep.subr.mxu0 0.0
    %2128 = vmatpush1.msra.mxu0 0.0
    %2129 = vmatprep.subr.mxu0 0.0
    %2130 = vmatpush1.msra.mxu0 0.0
    %2131 = vmatprep.subr.mxu0 0.0
    %2132 = vmatpush1.msra.mxu0 0.0
    %2133 = vmatprep.subr.mxu0 0.0
    %2134 = vmatpush1.msra.mxu0 0.0
    %2135 = vmatprep.subr.mxu0 0.0
    %2136 = vmatpush1.msra.mxu0 0.0
    %2137 = vmatprep.subr.mxu0 0.0
    %2138 = vmatpush1.msra.mxu0 0.0
    %2139 = vmatprep.subr.mxu0 0.0
    %2140 = vmatpush1.msra.mxu0 0.0
    %2141 = vmatprep.subr.mxu0 0.0
    %2142 = vmatpush1.msra.mxu0 0.0
    %2143 = vmatprep.subr.mxu0 0.0
    %2144 = vmatpush1.msra.mxu0 0.0
    %2145 = vmatprep.mubr.f32.mxu0 0.0
    %2146 = vmatmul.mubr.f32.gmra.mrb[0].mxu0 %v2076
    %v2147 = vpop.f32.mrb[0].mxu0
    %v2148 = vadd.f32 0.0, %v2147
    %v2149 = vpop.f32.mrb[0].mxu0
    %2150 = vmatprep.mubr.f32.mxu0 0.0
    %2151 = vmatmul.mubr.f32.gmra.mrb[0].mxu0 %v2079
    %v2152 = vpop.f32.mrb[0].mxu0
    %v2153 = vadd.f32 0.0, %v2152
    %v2154 = vpop.f32.mrb[0].mxu0
    %2155 = vdwg.mxu0
    %v2156 = vadd.f32 %v1934, %v2148
    %v2157 = vadd.f32 %v1935, %v2153
    %2158 = vst.msk [vmem:[#allocation13] sm:$0xff] %vm127, %v2156
    %2159 = vst.msk [vmem:[#allocation13 + $0x8] sm:$0xff] %vm127, %v2157
    // Predicated region
    $region66: #{tpu_custom_call.1} parent=1 // pred_check
      _
    $region67: #{tpu_custom_call.1} parent=1 // pred_check_branch
      %2161 = sbr.rel (0) target = $region69
    $region68: #{tpu_custom_call.1} parent=1 // pred_region
      %s2163 = ssub.s32 256, 256
      %2164 = vsyncadd [#allocation4], %s2163
      %s2165 = sshll.u32 [#allocation13], 4
      %s2166 = int_to_ptr.vmem [resolvable:$true] %s2165
      %2171 = dma.vmem_to_hbm [thread:$0]  %s2166, 256, %s10, [#allocation4], 128, 128, 8
    $region69: #{tpu_custom_call.1} parent=1 // pred_fallthru
      _
    // Predicated region
    $region70: #{tpu_custom_call.1} parent=1 // pred_check
      _
    $region71: #{tpu_custom_call.1} parent=1 // pred_check_branch
      %2173 = sbr.rel (0) target = $region73
    $region72: #{tpu_custom_call.1} parent=1 // pred_region
      %2174 = dma.done [#allocation4], 256
    $region73: #{tpu_custom_call.1} parent=1 // pred_fallthru
      _
    %2175 = vsyncpa [#allocation3], 1
    %2176 = vsyncpa [#allocation6], 1
    %2177 = vsyncpa [#allocation9], 1
    %2178 = vsyncpa [#allocation12], 1
    %2179 = vsyncpa [#allocation4], 1

</llo_original>
